<compile_context>
chip_gen: v5e
topology: v5e:2x2
jax: 0.10.0
libtpu: 0.0.40
codegen_flags: <defaults>
</compile_context>

<pallas_src>
import jax
import jax.numpy as jnp
from jax import lax
from jax.experimental import pallas as pl
from jax.experimental.pallas import tpu as pltpu


def _gelu_tanh(x):
    c = 0.7978845608028654  # sqrt(2/pi)
    return 0.5 * x * (1.0 + jnp.tanh(c * (x + 0.044715 * x * x * x)))


def _graphsage_kernel(x_ref, src_ref, idx_ref, w1_ref, b1_ref, w2_ref, b2_ref,
                      out_ref):
    """G batch elements per grid step. Everything node-major / lane-dense in VMEM.

    x_ref   : (G, N,  C)   node features for the concat branch
    src_ref : (G, Ns, C)   gather source (== x when y is None)
    idx_ref : (G, N,  K)   int32 neighbor indices into [0, Ns)
    w1_ref  : (C, C)       block-diagonal grouped-conv1 weight (in, out)
    b1_ref  : (1, C)
    w2_ref  : (2C, Co)     block-diagonal grouped-conv2 weight (in, out)
    b2_ref  : (1, Co)
    out_ref : (G, N, Co)
    """
    G, N, C = x_ref.shape
    Ns = src_ref.shape[1]
    K = idx_ref.shape[2]

    w1 = w1_ref[...]
    b1 = b1_ref[...]
    w2 = w2_ref[...]
    b2 = b2_ref[...]

    # Lane iota reused by every one-hot compare (tiny; rebuilt per step for free).
    s_iota = lax.broadcasted_iota(jnp.int32, (N, Ns), 1)

    for g in range(G):  # unrolled; G <= 4
        # --- nn1 BEFORE the gather (exact reorder): GELU on Ns rows, not N*K ----
        h_src = jnp.dot(src_ref[g], w1, preferred_element_type=jnp.float32) + b1
        h_src = _gelu_tanh(h_src)                                   # (Ns, C)

        # --- neighbor gather as a k-major one-hot MXU matmul -------------------
        idx_nk = idx_ref[g]                                         # (N, K) int32
        slabs = [(s_iota == idx_nk[:, k:k + 1]).astype(jnp.float32)
                 for k in range(K)]                                  # K x (N, Ns)
        onehot = jnp.concatenate(slabs, axis=0)                      # (K*N, Ns)
        gathered = jnp.dot(onehot, h_src,
                           preferred_element_type=jnp.float32)       # (K*N, C)

        # --- max over K: K-1 elementwise maxima over (N, C) slabs (VPU only) ---
        xj = gathered[0:N, :]
        for k in range(1, K):
            xj = jnp.maximum(xj, gathered[k * N:(k + 1) * N, :])     # (N, C)

        # --- nn2: cat([x, x_j], channel) -> block-diagonal matmul + bias + GELU -
        cat = jnp.concatenate([x_ref[g], xj], axis=-1)               # (N, 2C)
        out = jnp.dot(cat, w2, preferred_element_type=jnp.float32) + b2
        out_ref[g] = _gelu_tanh(out).astype(out_ref.dtype)           # (N, Co)


def prepare_params(params, groups=4):
    """One-time transform of PyTorch-layout params into kernel layout.

    Grouped Conv2d(Cin, Cout, 1, groups=g) weight (Cout, Cin//g, 1, 1) becomes a
    (Cin, Cout) block-diagonal matrix so the whole conv is a single matmul.
    Run once at parameter-load time (off the per-call path).
    """
    def block_diag(w):
        cout, cin_g = w.shape[0], w.shape[1]
        cout_g = cout // groups
        cin = cin_g * groups
        wbd = jnp.zeros((cin, cout), jnp.float32)
        for g in range(groups):
            blk = w[g * cout_g:(g + 1) * cout_g, :, 0, 0]            # (cout_g, cin_g)
            wbd = wbd.at[g * cin_g:(g + 1) * cin_g,
                         g * cout_g:(g + 1) * cout_g].set(blk.T)
        return wbd

    return {
        "w1": block_diag(params["nn1_w"]),
        "b1": params["nn1_b"].reshape(1, -1).astype(jnp.float32),
        "w2": block_diag(params["nn2_w"]),
        "b2": params["nn2_b"].reshape(1, -1).astype(jnp.float32),
    }


def _pick_group(B):
    """Batch elements per grid step: amortize per-step overhead on single-TC chips
    while keeping >= 2 grid steps (both v7x TensorCores busy) whenever B >= 2."""
    best = 1
    for g in (2, 3, 4):
        if B % g == 0 and (B // g) >= 2:
            best = g
    return best


@jax.jit
def graph_sage_forward(x, edge_index0, prepared, y=None):
    """x: (B, C, N, 1); edge_index0: (B, N, K) int; y: optional (B, C, Ns, 1).

    Returns (B, Cout, N, 1) to match the PyTorch module output layout.
    """
    B, C, N, _ = x.shape
    src = x if y is None else y
    Ns = src.shape[2]
    K = edge_index0.shape[-1]
    Co = prepared["b2"].shape[-1]
    G = _pick_group(B)

    # Layout plumbing stays in the wrapper (cheap XLA ops, fused under jit):
    x_nc = jnp.transpose(x[..., 0], (0, 2, 1))                       # (B, N, C)
    src_nc = jnp.transpose(src[..., 0], (0, 2, 1))                   # (B, Ns, C)
    idx = edge_index0.astype(jnp.int32)                              # (B, N, K)

    out = pl.pallas_call(
        _graphsage_kernel,
        out_shape=jax.ShapeDtypeStruct((B, N, Co), jnp.float32),
        grid_spec=pltpu.PrefetchScalarGridSpec(
            num_scalar_prefetch=0,
            grid=(B // G,),
            in_specs=[
                pl.BlockSpec((G, N, C), lambda b: (b, 0, 0)),
                pl.BlockSpec((G, Ns, C), lambda b: (b, 0, 0)),
                pl.BlockSpec((G, N, K), lambda b: (b, 0, 0)),
                pl.BlockSpec((C, C), lambda b: (0, 0)),
                pl.BlockSpec((1, C), lambda b: (0, 0)),
                pl.BlockSpec((2 * C, Co), lambda b: (0, 0)),
                pl.BlockSpec((1, Co), lambda b: (0, 0)),
            ],
            out_specs=pl.BlockSpec((G, N, Co), lambda b: (b, 0, 0)),
        ),
        compiler_params=pltpu.CompilerParams(
            dimension_semantics=("parallel",)),
    )(x_nc, src_nc, idx, prepared["w1"], prepared["b1"],
      prepared["w2"], prepared["b2"])

    return jnp.transpose(out, (0, 2, 1))[..., None]                  # (B, Co, N, 1)


def _reference(x, edge_index0, params, groups=4, y=None):
    """Pure-JAX reference mirroring the PyTorch GraphSAGE forward (NCHW-style)."""
    src = x if y is None else y
    src_nodes = src[..., 0]                                          # (B, C, Ns)
    # batched_index_select: x_j[b, c, n, k] = src[b, c, idx[b, n, k], 0]
    x_j = jax.vmap(lambda xb, ib: xb[:, ib])(src_nodes, edge_index0)  # (B,C,N,K)

    def grouped_conv(inp, w, b):
        B_, Cin, N_, K_ = inp.shape
        Cout = w.shape[0]
        xg = inp.reshape(B_, groups, Cin // groups, N_, K_)
        wg = w[:, :, 0, 0].reshape(groups, Cout // groups, Cin // groups)
        yv = jnp.einsum("bgcnk,goc->bgonk", xg, wg,
                        precision=jax.lax.Precision.HIGHEST)
        return yv.reshape(B_, Cout, N_, K_) + b[None, :, None, None]

    h = _gelu_tanh(grouped_conv(x_j, params["nn1_w"], params["nn1_b"]))
    h_max = jnp.max(h, axis=-1, keepdims=True)                       # (B, C, N, 1)
    cat = jnp.concatenate([x, h_max], axis=1)                        # (B, 2C, N, 1)
    return _gelu_tanh(grouped_conv(cat, params["nn2_w"], params["nn2_b"]))


if __name__ == "__main__":
    # in_channels=128, out_channels=128, groups=4, N=64 nodes, K=8 neighbors, B=2
    B, C, N, K = 2, 128, 64, 8
    Cout = 128
    groups = 4

    key = jax.random.PRNGKey(0)
    ks = jax.random.split(key, 6)
    x = jax.random.normal(ks[0], (B, C, N, 1), jnp.float32)
    edge_index = jax.random.randint(ks[1], (2, B, N, K), 0, N, dtype=jnp.int32)

    params = {
        "nn1_w": jax.random.normal(ks[2], (C, C // groups, 1, 1), jnp.float32) * 0.1,
        "nn1_b": jax.random.normal(ks[3], (C,), jnp.float32) * 0.1,
        "nn2_w": jax.random.normal(ks[4], (Cout, 2 * C // groups, 1, 1),
                                   jnp.float32) * 0.1,
        "nn2_b": jax.random.normal(ks[5], (Cout,), jnp.float32) * 0.1,
    }

    prepared = prepare_params(params, groups=groups)   # one-time, off the hot path

    out = graph_sage_forward(x, edge_index[0], prepared)
    jax.block_until_ready(out)
    assert out.shape == (B, Cout, N, 1), out.shape

    ref = _reference(x, edge_index[0], params, groups=groups)
    max_err = jnp.max(jnp.abs(out - ref))
    assert jnp.allclose(out, ref, rtol=1e-3, atol=1e-3), max_err

    print("KERNEL_OK")
</pallas_src>

<mosaic_0001>
module attributes {stable_mosaic.version = 11 : i64} {
  func.func @_graphsage_kernel(%arg0: i32, %arg1: memref<1x64x128xf32, #tpu.memory_space<vmem>>, %arg2: memref<1x64x128xf32, #tpu.memory_space<vmem>>, %arg3: memref<1x64x8xi32, #tpu.memory_space<vmem>>, %arg4: memref<128x128xf32, #tpu.memory_space<vmem>>, %arg5: memref<1x128xf32, #tpu.memory_space<vmem>>, %arg6: memref<256x128xf32, #tpu.memory_space<vmem>>, %arg7: memref<1x128xf32, #tpu.memory_space<vmem>>, %arg8: memref<1x64x128xf32, #tpu.memory_space<vmem>>) attributes {dimension_semantics = [#tpu.dimension_semantics<parallel>], iteration_bounds = array<i64: 2>, scalar_prefetch = 0 : i64, scratch_operands = 0 : i64, tpu.core_type = #tpu.core_type<tc>, window_params = [{transform_indices = @transform_0, window_bounds = array<i64: 1, 64, 128>}, {transform_indices = @transform_1, window_bounds = array<i64: 1, 64, 128>}, {transform_indices = @transform_2, window_bounds = array<i64: 1, 64, 8>}, {pipeline_mode = #tpu.pipeline_mode<synchronous>, transform_indices = @transform_3, window_bounds = array<i64: 128, 128>}, {pipeline_mode = #tpu.pipeline_mode<synchronous>, transform_indices = @transform_4, window_bounds = array<i64: 1, 128>}, {pipeline_mode = #tpu.pipeline_mode<synchronous>, transform_indices = @transform_5, window_bounds = array<i64: 256, 128>}, {pipeline_mode = #tpu.pipeline_mode<synchronous>, transform_indices = @transform_6, window_bounds = array<i64: 1, 128>}, {transform_indices = @transform_7, window_bounds = array<i64: 1, 64, 128>}]} {
    %c0 = arith.constant 0 : index
    %c0_0 = arith.constant 0 : index
    %0 = vector.load %arg4[%c0, %c0_0] : memref<128x128xf32, #tpu.memory_space<vmem>>, vector<128x128xf32>
    %c0_1 = arith.constant 0 : index
    %c0_2 = arith.constant 0 : index
    %1 = vector.load %arg5[%c0_1, %c0_2] : memref<1x128xf32, #tpu.memory_space<vmem>>, vector<1x128xf32>
    %c0_3 = arith.constant 0 : index
    %c0_4 = arith.constant 0 : index
    %2 = vector.load %arg6[%c0_3, %c0_4] : memref<256x128xf32, #tpu.memory_space<vmem>>, vector<256x128xf32>
    %c0_5 = arith.constant 0 : index
    %c0_6 = arith.constant 0 : index
    %3 = vector.load %arg7[%c0_5, %c0_6] : memref<1x128xf32, #tpu.memory_space<vmem>>, vector<1x128xf32>
    %4 = tpu.iota {dimensions = array<i32: 1>} : vector<64x64xi32>
    %c0_7 = arith.constant 0 : index
    %c0_8 = arith.constant 0 : index
    %c0_9 = arith.constant 0 : index
    %5 = vector.load %arg2[%c0_7, %c0_8, %c0_9] : memref<1x64x128xf32, #tpu.memory_space<vmem>>, vector<1x64x128xf32>
    %6 = vector.shape_cast %5 : vector<1x64x128xf32> to vector<64x128xf32>
    %cst = arith.constant dense<0.000000e+00> : vector<64x128xf32>
    %7 = tpu.matmul %6, %0, %cst {dimension_numbers = #tpu.dot_dimension_numbers<[1], [0], [0], [1], [0, 0, 1, 1], [], []>} : vector<64x128xf32>, vector<128x128xf32>, vector<64x128xf32> -> vector<64x128xf32>
    %8 = vector.broadcast %1 : vector<1x128xf32> to vector<64x128xf32>
    %9 = arith.addf %7, %8 : vector<64x128xf32>
    %cst_10 = arith.constant 5.000000e-01 : f32
    %10 = vector.broadcast %cst_10 : f32 to vector<64x128xf32>
    %11 = arith.mulf %10, %9 : vector<64x128xf32>
    %cst_11 = arith.constant 4.471500e-02 : f32
    %12 = vector.broadcast %cst_11 : f32 to vector<64x128xf32>
    %13 = arith.mulf %12, %9 : vector<64x128xf32>
    %14 = arith.mulf %13, %9 : vector<64x128xf32>
    %15 = arith.mulf %14, %9 : vector<64x128xf32>
    %16 = arith.addf %9, %15 : vector<64x128xf32>
    %cst_12 = arith.constant 0.797884583 : f32
    %17 = vector.broadcast %cst_12 : f32 to vector<64x128xf32>
    %18 = arith.mulf %17, %16 : vector<64x128xf32>
    %19 = math.tanh %18 : vector<64x128xf32>
    %cst_13 = arith.constant 1.000000e+00 : f32
    %20 = vector.broadcast %cst_13 : f32 to vector<64x128xf32>
    %21 = arith.addf %20, %19 : vector<64x128xf32>
    %22 = arith.mulf %11, %21 : vector<64x128xf32>
    %c0_14 = arith.constant 0 : index
    %c0_15 = arith.constant 0 : index
    %c0_16 = arith.constant 0 : index
    %23 = vector.load %arg3[%c0_14, %c0_15, %c0_16] : memref<1x64x8xi32, #tpu.memory_space<vmem>>, vector<1x64x8xi32>
    %24 = vector.shape_cast %23 : vector<1x64x8xi32> to vector<64x8xi32>
    %25 = vector.extract_strided_slice %24 {offsets = [0, 0], sizes = [64, 1], strides = [1, 1]} : vector<64x8xi32> to vector<64x1xi32>
    %26 = vector.broadcast %25 : vector<64x1xi32> to vector<64x64xi32>
    %27 = arith.cmpi eq, %4, %26 : vector<64x64xi32>
    %28 = arith.extui %27 : vector<64x64xi1> to vector<64x64xi32>
    %29 = arith.sitofp %28 : vector<64x64xi32> to vector<64x64xf32>
    %30 = vector.extract_strided_slice %24 {offsets = [0, 1], sizes = [64, 1], strides = [1, 1]} : vector<64x8xi32> to vector<64x1xi32>
    %31 = vector.broadcast %30 : vector<64x1xi32> to vector<64x64xi32>
    %32 = arith.cmpi eq, %4, %31 : vector<64x64xi32>
    %33 = arith.extui %32 : vector<64x64xi1> to vector<64x64xi32>
    %34 = arith.sitofp %33 : vector<64x64xi32> to vector<64x64xf32>
    %35 = vector.extract_strided_slice %24 {offsets = [0, 2], sizes = [64, 1], strides = [1, 1]} : vector<64x8xi32> to vector<64x1xi32>
    %36 = vector.broadcast %35 : vector<64x1xi32> to vector<64x64xi32>
    %37 = arith.cmpi eq, %4, %36 : vector<64x64xi32>
    %38 = arith.extui %37 : vector<64x64xi1> to vector<64x64xi32>
    %39 = arith.sitofp %38 : vector<64x64xi32> to vector<64x64xf32>
    %40 = vector.extract_strided_slice %24 {offsets = [0, 3], sizes = [64, 1], strides = [1, 1]} : vector<64x8xi32> to vector<64x1xi32>
    %41 = vector.broadcast %40 : vector<64x1xi32> to vector<64x64xi32>
    %42 = arith.cmpi eq, %4, %41 : vector<64x64xi32>
    %43 = arith.extui %42 : vector<64x64xi1> to vector<64x64xi32>
    %44 = arith.sitofp %43 : vector<64x64xi32> to vector<64x64xf32>
    %45 = vector.extract_strided_slice %24 {offsets = [0, 4], sizes = [64, 1], strides = [1, 1]} : vector<64x8xi32> to vector<64x1xi32>
    %46 = vector.broadcast %45 : vector<64x1xi32> to vector<64x64xi32>
    %47 = arith.cmpi eq, %4, %46 : vector<64x64xi32>
    %48 = arith.extui %47 : vector<64x64xi1> to vector<64x64xi32>
    %49 = arith.sitofp %48 : vector<64x64xi32> to vector<64x64xf32>
    %50 = vector.extract_strided_slice %24 {offsets = [0, 5], sizes = [64, 1], strides = [1, 1]} : vector<64x8xi32> to vector<64x1xi32>
    %51 = vector.broadcast %50 : vector<64x1xi32> to vector<64x64xi32>
    %52 = arith.cmpi eq, %4, %51 : vector<64x64xi32>
    %53 = arith.extui %52 : vector<64x64xi1> to vector<64x64xi32>
    %54 = arith.sitofp %53 : vector<64x64xi32> to vector<64x64xf32>
    %55 = vector.extract_strided_slice %24 {offsets = [0, 6], sizes = [64, 1], strides = [1, 1]} : vector<64x8xi32> to vector<64x1xi32>
    %56 = vector.broadcast %55 : vector<64x1xi32> to vector<64x64xi32>
    %57 = arith.cmpi eq, %4, %56 : vector<64x64xi32>
    %58 = arith.extui %57 : vector<64x64xi1> to vector<64x64xi32>
    %59 = arith.sitofp %58 : vector<64x64xi32> to vector<64x64xf32>
    %60 = vector.extract_strided_slice %24 {offsets = [0, 7], sizes = [64, 1], strides = [1, 1]} : vector<64x8xi32> to vector<64x1xi32>
    %61 = vector.broadcast %60 : vector<64x1xi32> to vector<64x64xi32>
    %62 = arith.cmpi eq, %4, %61 : vector<64x64xi32>
    %63 = arith.extui %62 : vector<64x64xi1> to vector<64x64xi32>
    %64 = arith.sitofp %63 : vector<64x64xi32> to vector<64x64xf32>
    %65 = tpu.concatenate %29, %34, %39, %44, %49, %54, %59, %64 in 0 : vector<64x64xf32>, vector<64x64xf32>, vector<64x64xf32>, vector<64x64xf32>, vector<64x64xf32>, vector<64x64xf32>, vector<64x64xf32>, vector<64x64xf32> -> vector<512x64xf32>
    %cst_17 = arith.constant dense<0.000000e+00> : vector<512x128xf32>
    %66 = tpu.matmul %65, %22, %cst_17 {dimension_numbers = #tpu.dot_dimension_numbers<[1], [0], [0], [1], [0, 0, 1, 1], [], []>} : vector<512x64xf32>, vector<64x128xf32>, vector<512x128xf32> -> vector<512x128xf32>
    %67 = vector.extract_strided_slice %66 {offsets = [0, 0], sizes = [64, 128], strides = [1, 1]} : vector<512x128xf32> to vector<64x128xf32>
    %68 = vector.extract_strided_slice %66 {offsets = [64, 0], sizes = [64, 128], strides = [1, 1]} : vector<512x128xf32> to vector<64x128xf32>
    %69 = arith.maximumf %67, %68 : vector<64x128xf32>
    %70 = vector.extract_strided_slice %66 {offsets = [128, 0], sizes = [64, 128], strides = [1, 1]} : vector<512x128xf32> to vector<64x128xf32>
    %71 = arith.maximumf %69, %70 : vector<64x128xf32>
    %72 = vector.extract_strided_slice %66 {offsets = [192, 0], sizes = [64, 128], strides = [1, 1]} : vector<512x128xf32> to vector<64x128xf32>
    %73 = arith.maximumf %71, %72 : vector<64x128xf32>
    %74 = vector.extract_strided_slice %66 {offsets = [256, 0], sizes = [64, 128], strides = [1, 1]} : vector<512x128xf32> to vector<64x128xf32>
    %75 = arith.maximumf %73, %74 : vector<64x128xf32>
    %76 = vector.extract_strided_slice %66 {offsets = [320, 0], sizes = [64, 128], strides = [1, 1]} : vector<512x128xf32> to vector<64x128xf32>
    %77 = arith.maximumf %75, %76 : vector<64x128xf32>
    %78 = vector.extract_strided_slice %66 {offsets = [384, 0], sizes = [64, 128], strides = [1, 1]} : vector<512x128xf32> to vector<64x128xf32>
    %79 = arith.maximumf %77, %78 : vector<64x128xf32>
    %80 = vector.extract_strided_slice %66 {offsets = [448, 0], sizes = [64, 128], strides = [1, 1]} : vector<512x128xf32> to vector<64x128xf32>
    %81 = arith.maximumf %79, %80 : vector<64x128xf32>
    %c0_18 = arith.constant 0 : index
    %c0_19 = arith.constant 0 : index
    %c0_20 = arith.constant 0 : index
    %82 = vector.load %arg1[%c0_18, %c0_19, %c0_20] : memref<1x64x128xf32, #tpu.memory_space<vmem>>, vector<1x64x128xf32>
    %83 = vector.shape_cast %82 : vector<1x64x128xf32> to vector<64x128xf32>
    %84 = tpu.concatenate %83, %81 in 1 : vector<64x128xf32>, vector<64x128xf32> -> vector<64x256xf32>
    %cst_21 = arith.constant dense<0.000000e+00> : vector<64x128xf32>
    %85 = tpu.matmul %84, %2, %cst_21 {dimension_numbers = #tpu.dot_dimension_numbers<[1], [0], [0], [1], [0, 0, 1, 1], [], []>} : vector<64x256xf32>, vector<256x128xf32>, vector<64x128xf32> -> vector<64x128xf32>
    %86 = vector.broadcast %3 : vector<1x128xf32> to vector<64x128xf32>
    %87 = arith.addf %85, %86 : vector<64x128xf32>
    %cst_22 = arith.constant 5.000000e-01 : f32
    %88 = vector.broadcast %cst_22 : f32 to vector<64x128xf32>
    %89 = arith.mulf %88, %87 : vector<64x128xf32>
    %cst_23 = arith.constant 4.471500e-02 : f32
    %90 = vector.broadcast %cst_23 : f32 to vector<64x128xf32>
    %91 = arith.mulf %90, %87 : vector<64x128xf32>
    %92 = arith.mulf %91, %87 : vector<64x128xf32>
    %93 = arith.mulf %92, %87 : vector<64x128xf32>
    %94 = arith.addf %87, %93 : vector<64x128xf32>
    %cst_24 = arith.constant 0.797884583 : f32
    %95 = vector.broadcast %cst_24 : f32 to vector<64x128xf32>
    %96 = arith.mulf %95, %94 : vector<64x128xf32>
    %97 = math.tanh %96 : vector<64x128xf32>
    %cst_25 = arith.constant 1.000000e+00 : f32
    %98 = vector.broadcast %cst_25 : f32 to vector<64x128xf32>
    %99 = arith.addf %98, %97 : vector<64x128xf32>
    %100 = arith.mulf %89, %99 : vector<64x128xf32>
    %c0_26 = arith.constant 0 : index
    %c0_27 = arith.constant 0 : index
    %c0_28 = arith.constant 0 : index
    %101 = vector.load %arg8[%c0_26, %c0_27, %c0_28] : memref<1x64x128xf32, #tpu.memory_space<vmem>>, vector<1x64x128xf32>
    %102 = vector.shape_cast %101 : vector<1x64x128xf32> to vector<64x128xf32>
    %103 = vector.shape_cast %100 : vector<64x128xf32> to vector<1x64x128xf32>
    tpu.vector_store %arg8[%c0_26, %c0_27, %c0_28], %103 {strides = array<i32>} : memref<1x64x128xf32, #tpu.memory_space<vmem>>, vector<1x64x128xf32>,
    return
  }
  func.func @transform_0(%arg0: i32) -> (i32, i32, i32) {
    %c0_i32 = arith.constant 0 : i32
    %c0_i32_0 = arith.constant 0 : i32
    %c0_i32_1 = arith.constant 0 : i32
    return %arg0, %c0_i32, %c0_i32_0 : i32, i32, i32
  }
  func.func @transform_1(%arg0: i32) -> (i32, i32, i32) {
    %c0_i32 = arith.constant 0 : i32
    %c0_i32_0 = arith.constant 0 : i32
    %c0_i32_1 = arith.constant 0 : i32
    return %arg0, %c0_i32, %c0_i32_0 : i32, i32, i32
  }
  func.func @transform_2(%arg0: i32) -> (i32, i32, i32) {
    %c0_i32 = arith.constant 0 : i32
    %c0_i32_0 = arith.constant 0 : i32
    %c0_i32_1 = arith.constant 0 : i32
    return %arg0, %c0_i32, %c0_i32_0 : i32, i32, i32
  }
  func.func @transform_3(%arg0: i32) -> (i32, i32) {
    %c0_i32 = arith.constant 0 : i32
    %c0_i32_0 = arith.constant 0 : i32
    %c0_i32_1 = arith.constant 0 : i32
    return %c0_i32, %c0_i32_0 : i32, i32
  }
  func.func @transform_4(%arg0: i32) -> (i32, i32) {
    %c0_i32 = arith.constant 0 : i32
    %c0_i32_0 = arith.constant 0 : i32
    %c0_i32_1 = arith.constant 0 : i32
    return %c0_i32, %c0_i32_0 : i32, i32
  }
  func.func @transform_5(%arg0: i32) -> (i32, i32) {
    %c0_i32 = arith.constant 0 : i32
    %c0_i32_0 = arith.constant 0 : i32
    %c0_i32_1 = arith.constant 0 : i32
    return %c0_i32, %c0_i32_0 : i32, i32
  }
  func.func @transform_6(%arg0: i32) -> (i32, i32) {
    %c0_i32 = arith.constant 0 : i32
    %c0_i32_0 = arith.constant 0 : i32
    %c0_i32_1 = arith.constant 0 : i32
    return %c0_i32, %c0_i32_0 : i32, i32
  }
  func.func @transform_7(%arg0: i32) -> (i32, i32, i32) {
    %c0_i32 = arith.constant 0 : i32
    %c0_i32_0 = arith.constant 0 : i32
    %c0_i32_1 = arith.constant 0 : i32
    return %arg0, %c0_i32, %c0_i32_0 : i32, i32, i32
  }
}

</mosaic_0001>

<llo_original>
// kernel: graph_sage_forward.1
$region0: #{graph_sage_forward.1}
  #allocation0 [shape = 'u32[]', space=smem, size = 0x4, offset = 0x4, fixed_abs, tag = 'smem constant byte address 0x4 - core index']
  #allocation1 [shape = 'u32[72,128]{1,0:T(1,128)}', space=vmem, size = 0x9000, scoped, tag = 'internal scratch']
  %s0 = inlined_call_operand.vmem [shape: f32[2,64,128], index: 0, kind: input, shape index: {}, may-alias: {0,1}]
  %s1 = inlined_call_operand.vmem [shape: f32[2,64,128], index: 1, kind: input, shape index: {}, may-alias: {0,1}]
  %s2 = inlined_call_operand.vmem [shape: s32[2,64,8], index: 2, kind: input, shape index: {}]
  %s3 = inlined_call_operand.hbm [shape: f32[128,128], index: 3, kind: input, shape index: {}]
  %s4 = inlined_call_operand.vmem [shape: f32[1,128], index: 4, kind: input, shape index: {}]
  %s5 = inlined_call_operand.hbm [shape: f32[256,128], index: 5, kind: input, shape index: {}]
  %s6 = inlined_call_operand.vmem [shape: f32[1,128], index: 6, kind: input, shape index: {}]
  %s7 = inlined_call_operand.hbm [shape: f32[2,64,128], index: 7, kind: output, shape index: {}]
  %s8 = sld [smem:[#allocation0]]
  $region69: #{graph_sage_forward.1} parent=0
    _
  %s10 = ssub.s32 1, %s8
  %s11 = scalar_select 0, %s10, %s8
  $region1: #{graph_sage_forward.1} parent=0
    #allocation2 [shape = 'u8[65536]{0}', space=vmem, size = 0x10000, scoped, tag = 'input window, operand 3, single buffered']
    #allocation3 [shape = 's32[2]{0}', space=sflag, size = 0x8, scoped, tag = 'scoped memory for graph_sage_forward.1']
    #allocation4 [shape = 's32[2]{0}', space=sflag, size = 0x8, scoped, tag = 'scoped memory for graph_sage_forward.1']
    #allocation5 [shape = 'u8[131072]{0}', space=vmem, size = 0x20000, scoped, tag = 'input window, operand 5, single buffered']
    #allocation6 [shape = 's32[1]{0}', space=sflag, size = 0x4, scoped, tag = 'scoped memory for graph_sage_forward.1']
    #allocation7 [shape = 'u8[65536]{0}', space=vmem, size = 0x10000, scoped, tag = 'output window, operand 0']
    %12 = vsyncpa [#allocation3], 0
    %13 = vsyncpa [#allocation6], 0
    %14 = vsyncpa [#allocation4], 0
    %s15 = scalar_lea.sflag [#allocation4], 1
    %16 = vsyncpa %s15, 0
    loop: start=0, step=1, limit=4
    $region2: #{graph_sage_forward.1} parent=1 // loop_pre_header
      _
    $region3: #{graph_sage_forward.1} parent=1 // loop_header
      %s18 = sphi 0, %s22
      %p19 = scmp.ge.s32.totalorder %s18, 4
      %s28 = sphi 0, %s30
      %s31 = sphi 0, %s28
      %s32 = sphi 0, %s31
      %s48 = sphi 0, %s32
      %s54 = sphi 0, %s56
      %s57 = sphi 0, %s54
      %s58 = sphi 0, %s57
      %s74 = sphi 0, %s58
      %s80 = sphi 0, %s82
      %s83 = sphi 0, %s80
      %s84 = sphi 0, %s83
      %s100 = sphi 0, %s84
      %s104 = sphi 0, %s104
      %s106 = sphi 0, %s104
      %s107 = sphi 0, %s106
      %s121 = sphi 0, %s107
      %s125 = sphi 0, %s125
      %s127 = sphi 0, %s125
      %s128 = sphi 0, %s127
      %s142 = sphi 0, %s128
      %s146 = sphi 0, %s146
      %s148 = sphi 0, %s146
      %s149 = sphi 0, %s148
      %s163 = sphi 0, %s149
      %s167 = sphi 0, %s167
      %s169 = sphi 0, %s167
      %s170 = sphi 0, %s169
      %s184 = sphi 0, %s170
      %s190 = sphi 0, %s192
      %s193 = sphi 0, %s190
      %s194 = sphi 0, %s193
      %s210 = sphi 0, %s194
    $region4: #{graph_sage_forward.1} parent=1 // loop_header_branch
      %21 = sbr.rel (%p19) target = $region8
    $region5: #{graph_sage_forward.1} parent=1 // loop_body
      %s23 = ssub.s32 %s18, 1
      %s24 = ssub.s32 %s18, 2
      %s25 = sadd.s32 %s18, 1
      %s26 = ssub.s32 %s18, %s25
      %p27 = scmp.eq.s32.totalorder %s26, 0
      %s29 = sadd.s32 %s28, 1
      %s30 = scalar_select %p27, %s28, %s29
      %p33 = pneg %p27
      %p34 = scmp.eq.s32.totalorder %s18, 1
      %p35 = por %p33, %p34
      %p36 = scmp.ne.s32.totalorder %s28, %s31
      %p37 = scmp.eq.s32.totalorder %s18, 0
      %p38 = por %p36, %p37
      %p39 = scmp.ne.s32.totalorder %s28, %s31
      %p40 = scmp.eq.s32.totalorder %s23, 1
      %p41 = por %p39, %p40
      %p42 = scmp.ne.s32.totalorder %s31, %s32
      %p43 = scmp.eq.s32.totalorder %s23, 0
      %p44 = por %p42, %p43
      %p45 = scmp.ne.s32.totalorder %s31, %s32
      %p46 = scmp.eq.s32.totalorder %s24, 1
      %p47 = por %p45, %p46
      %p49 = scmp.ne.s32.totalorder %s32, %s48
      %p50 = scmp.eq.s32.totalorder %s24, 0
      %p51 = por %p49, %p50
      %s52 = ssub.s32 %s18, %s25
      %p53 = scmp.eq.s32.totalorder %s52, 0
      %s55 = sadd.s32 %s54, 1
      %s56 = scalar_select %p53, %s54, %s55
      %p59 = pneg %p53
      %p60 = scmp.eq.s32.totalorder %s18, 1
      %p61 = por %p59, %p60
      %p62 = scmp.ne.s32.totalorder %s54, %s57
      %p63 = scmp.eq.s32.totalorder %s18, 0
      %p64 = por %p62, %p63
      %p65 = scmp.ne.s32.totalorder %s54, %s57
      %p66 = scmp.eq.s32.totalorder %s23, 1
      %p67 = por %p65, %p66
      %p68 = scmp.ne.s32.totalorder %s57, %s58
      %p69 = scmp.eq.s32.totalorder %s23, 0
      %p70 = por %p68, %p69
      %p71 = scmp.ne.s32.totalorder %s57, %s58
      %p72 = scmp.eq.s32.totalorder %s24, 1
      %p73 = por %p71, %p72
      %p75 = scmp.ne.s32.totalorder %s58, %s74
      %p76 = scmp.eq.s32.totalorder %s24, 0
      %p77 = por %p75, %p76
      %s78 = ssub.s32 %s18, %s25
      %p79 = scmp.eq.s32.totalorder %s78, 0
      %s81 = sadd.s32 %s80, 1
      %s82 = scalar_select %p79, %s80, %s81
      %p85 = pneg %p79
      %p86 = scmp.eq.s32.totalorder %s18, 1
      %p87 = por %p85, %p86
      %p88 = scmp.ne.s32.totalorder %s80, %s83
      %p89 = scmp.eq.s32.totalorder %s18, 0
      %p90 = por %p88, %p89
      %p91 = scmp.ne.s32.totalorder %s80, %s83
      %p92 = scmp.eq.s32.totalorder %s23, 1
      %p93 = por %p91, %p92
      %p94 = scmp.ne.s32.totalorder %s83, %s84
      %p95 = scmp.eq.s32.totalorder %s23, 0
      %p96 = por %p94, %p95
      %p97 = scmp.ne.s32.totalorder %s83, %s84
      %p98 = scmp.eq.s32.totalorder %s24, 1
      %p99 = por %p97, %p98
      %p101 = scmp.ne.s32.totalorder %s84, %s100
      %p102 = scmp.eq.s32.totalorder %s24, 0
      %p103 = por %p101, %p102
      %s105 = sadd.s32 %s104, 1
      %p108 = scmp.eq.s32.totalorder %s18, 1
      %p109 = scmp.ne.s32.totalorder %s104, %s106
      %p110 = scmp.eq.s32.totalorder %s18, 0
      %p111 = por %p109, %p110
      %p112 = scmp.ne.s32.totalorder %s104, %s106
      %p113 = scmp.eq.s32.totalorder %s23, 1
      %p114 = por %p112, %p113
      %p115 = scmp.ne.s32.totalorder %s106, %s107
      %p116 = scmp.eq.s32.totalorder %s23, 0
      %p117 = por %p115, %p116
      %p118 = scmp.ne.s32.totalorder %s106, %s107
      %p119 = scmp.eq.s32.totalorder %s24, 1
      %p120 = por %p118, %p119
      %p122 = scmp.ne.s32.totalorder %s107, %s121
      %p123 = scmp.eq.s32.totalorder %s24, 0
      %p124 = por %p122, %p123
      %s126 = sadd.s32 %s125, 1
      %p129 = scmp.eq.s32.totalorder %s18, 1
      %p130 = scmp.ne.s32.totalorder %s125, %s127
      %p131 = scmp.eq.s32.totalorder %s18, 0
      %p132 = por %p130, %p131
      %p133 = scmp.ne.s32.totalorder %s125, %s127
      %p134 = scmp.eq.s32.totalorder %s23, 1
      %p135 = por %p133, %p134
      %p136 = scmp.ne.s32.totalorder %s127, %s128
      %p137 = scmp.eq.s32.totalorder %s23, 0
      %p138 = por %p136, %p137
      %p139 = scmp.ne.s32.totalorder %s127, %s128
      %p140 = scmp.eq.s32.totalorder %s24, 1
      %p141 = por %p139, %p140
      %p143 = scmp.ne.s32.totalorder %s128, %s142
      %p144 = scmp.eq.s32.totalorder %s24, 0
      %p145 = por %p143, %p144
      %s147 = sadd.s32 %s146, 1
      %p150 = scmp.eq.s32.totalorder %s18, 1
      %p151 = scmp.ne.s32.totalorder %s146, %s148
      %p152 = scmp.eq.s32.totalorder %s18, 0
      %p153 = por %p151, %p152
      %p154 = scmp.ne.s32.totalorder %s146, %s148
      %p155 = scmp.eq.s32.totalorder %s23, 1
      %p156 = por %p154, %p155
      %p157 = scmp.ne.s32.totalorder %s148, %s149
      %p158 = scmp.eq.s32.totalorder %s23, 0
      %p159 = por %p157, %p158
      %p160 = scmp.ne.s32.totalorder %s148, %s149
      %p161 = scmp.eq.s32.totalorder %s24, 1
      %p162 = por %p160, %p161
      %p164 = scmp.ne.s32.totalorder %s149, %s163
      %p165 = scmp.eq.s32.totalorder %s24, 0
      %p166 = por %p164, %p165
      %s168 = sadd.s32 %s167, 1
      %p171 = scmp.eq.s32.totalorder %s18, 1
      %p172 = scmp.ne.s32.totalorder %s167, %s169
      %p173 = scmp.eq.s32.totalorder %s18, 0
      %p174 = por %p172, %p173
      %p175 = scmp.ne.s32.totalorder %s167, %s169
      %p176 = scmp.eq.s32.totalorder %s23, 1
      %p177 = por %p175, %p176
      %p178 = scmp.ne.s32.totalorder %s169, %s170
      %p179 = scmp.eq.s32.totalorder %s23, 0
      %p180 = por %p178, %p179
      %p181 = scmp.ne.s32.totalorder %s169, %s170
      %p182 = scmp.eq.s32.totalorder %s24, 1
      %p183 = por %p181, %p182
      %p185 = scmp.ne.s32.totalorder %s170, %s184
      %p186 = scmp.eq.s32.totalorder %s24, 0
      %p187 = por %p185, %p186
      %s188 = ssub.s32 %s18, %s25
      %p189 = scmp.eq.s32.totalorder %s188, 0
      %s191 = sadd.s32 %s190, 1
      %s192 = scalar_select %p189, %s190, %s191
      %p195 = pneg %p189
      %p196 = scmp.eq.s32.totalorder %s18, 1
      %p197 = por %p195, %p196
      %p198 = scmp.ne.s32.totalorder %s190, %s193
      %p199 = scmp.eq.s32.totalorder %s18, 0
      %p200 = por %p198, %p199
      %p201 = scmp.ne.s32.totalorder %s190, %s193
      %p202 = scmp.eq.s32.totalorder %s23, 1
      %p203 = por %p201, %p202
      %p204 = scmp.ne.s32.totalorder %s193, %s194
      %p205 = scmp.eq.s32.totalorder %s23, 0
      %p206 = por %p204, %p205
      %p207 = scmp.ne.s32.totalorder %s193, %s194
      %p208 = scmp.eq.s32.totalorder %s24, 1
      %p209 = por %p207, %p208
      %p211 = scmp.ne.s32.totalorder %s194, %s210
      %p212 = scmp.eq.s32.totalorder %s24, 0
      %p213 = por %p211, %p212
      %p214 = scmp.le.s32.totalorder 1, %s18
      %p215 = scmp.lt.s32.totalorder %s18, 3
      %p216 = pnand %p214, %p215
      %p217 = pneg %p216
      // Predicated region
      $region9: #{graph_sage_forward.1} parent=5 // pred_check
        _
      $region10: #{graph_sage_forward.1} parent=5 // pred_check_branch
        %219 = sbr.rel (%p216) target = $region12
      $region11: #{graph_sage_forward.1} parent=5 // pred_region
        %s220 = ssub.s32 %s18, 1
        // Predicated region
        $region13: #{graph_sage_forward.1} parent=11 // pred_check
          %p221 = pneg %p117
        $region14: #{graph_sage_forward.1} parent=11 // pred_check_branch
          %223 = sbr.rel (%p221) target = $region16
        $region15: #{graph_sage_forward.1} parent=11 // pred_region
          %225 = vsyncadd [#allocation3], 0
          %s226 = sshll.u32 %s3, 4
          %s227 = int_to_ptr.hbm [resolvable:$true] %s226
          %s228 = sshll.u32 [#allocation2], 4
          %s229 = int_to_ptr.vmem [resolvable:$true] %s228
          %234 = dma.hbm_to_vmem [thread:$0]  %s227, 2048, %s229, [#allocation3], 128, 128, 8
        $region16: #{graph_sage_forward.1} parent=11 // pred_fallthru
          _
        // Predicated region
        $region17: #{graph_sage_forward.1} parent=11 // pred_check
          %p235 = pneg %p138
        $region18: #{graph_sage_forward.1} parent=11 // pred_check_branch
          %237 = sbr.rel (%p235) target = $region20
        $region19: #{graph_sage_forward.1} parent=11 // pred_region
          _
        $region20: #{graph_sage_forward.1} parent=11 // pred_fallthru
          _
        // Predicated region
        $region21: #{graph_sage_forward.1} parent=11 // pred_check
          %p238 = pneg %p159
        $region22: #{graph_sage_forward.1} parent=11 // pred_check_branch
          %240 = sbr.rel (%p238) target = $region24
        $region23: #{graph_sage_forward.1} parent=11 // pred_region
          %242 = vsyncadd [#allocation6], 0
          %s243 = sshll.u32 %s5, 4
          %s244 = int_to_ptr.hbm [resolvable:$true] %s243
          %s245 = sshll.u32 [#allocation5], 4
          %s246 = int_to_ptr.vmem [resolvable:$true] %s245
          %251 = dma.hbm_to_vmem [thread:$0]  %s244, 4096, %s246, [#allocation6], 128, 128, 8
        $region24: #{graph_sage_forward.1} parent=11 // pred_fallthru
          _
        // Predicated region
        $region25: #{graph_sage_forward.1} parent=11 // pred_check
          %p252 = pneg %p180
        $region26: #{graph_sage_forward.1} parent=11 // pred_check_branch
          %254 = sbr.rel (%p252) target = $region28
        $region27: #{graph_sage_forward.1} parent=11 // pred_region
          _
        $region28: #{graph_sage_forward.1} parent=11 // pred_fallthru
          _
      $region12: #{graph_sage_forward.1} parent=5 // pred_fallthru
        _
      %p255 = scmp.lt.s32.totalorder %s18, 2
      // Predicated region
      $region29: #{graph_sage_forward.1} parent=5 // pred_check
        %p256 = pneg %p255
      $region30: #{graph_sage_forward.1} parent=5 // pred_check_branch
        %258 = sbr.rel (%p256) target = $region32
      $region31: #{graph_sage_forward.1} parent=5 // pred_region
        // Predicated region
        $region33: #{graph_sage_forward.1} parent=31 // pred_check
          %p259 = pneg %p38
        $region34: #{graph_sage_forward.1} parent=31 // pred_check_branch
          %261 = sbr.rel (%p259) target = $region36
        $region35: #{graph_sage_forward.1} parent=31 // pred_region
          %p262 = scmp.lt.s32.totalorder %s18, 1
          %s263 = scalar_select %p262, %s18, 1
          %s264 = smul.addr %s263, 8
          %s265 = smul.addr %s264, 8
          %s266 = scalar_lea.vmem %s0, %s265
        $region36: #{graph_sage_forward.1} parent=31 // pred_fallthru
          _
        // Predicated region
        $region37: #{graph_sage_forward.1} parent=31 // pred_check
          %p267 = pneg %p64
        $region38: #{graph_sage_forward.1} parent=31 // pred_check_branch
          %269 = sbr.rel (%p267) target = $region40
        $region39: #{graph_sage_forward.1} parent=31 // pred_region
          %p270 = scmp.lt.s32.totalorder %s18, 1
          %s271 = scalar_select %p270, %s18, 1
          %s272 = smul.addr %s271, 8
          %s273 = smul.addr %s272, 8
          %s274 = scalar_lea.vmem %s1, %s273
        $region40: #{graph_sage_forward.1} parent=31 // pred_fallthru
          _
        // Predicated region
        $region41: #{graph_sage_forward.1} parent=31 // pred_check
          %p275 = pneg %p90
        $region42: #{graph_sage_forward.1} parent=31 // pred_check_branch
          %277 = sbr.rel (%p275) target = $region44
        $region43: #{graph_sage_forward.1} parent=31 // pred_region
          %p278 = scmp.lt.s32.totalorder %s18, 1
          %s279 = scalar_select %p278, %s18, 1
          %s280 = smul.addr %s279, 8
          %s281 = smul.addr %s280, 8
          %s282 = scalar_lea.vmem %s2, %s281
        $region44: #{graph_sage_forward.1} parent=31 // pred_fallthru
          _
      $region32: #{graph_sage_forward.1} parent=5 // pred_fallthru
        _
      %p283 = scmp.le.s32.totalorder 1, %s18
      %p284 = scmp.lt.s32.totalorder %s18, 3
      %p285 = pnand %p283, %p284
      %p286 = pneg %p285
      // Predicated region
      $region45: #{graph_sage_forward.1} parent=5 // pred_check
        _
      $region46: #{graph_sage_forward.1} parent=5 // pred_check_branch
        %288 = sbr.rel (%p285) target = $region48
      $region47: #{graph_sage_forward.1} parent=5 // pred_region
        %s289 = ssub.s32 %s18, 1
        // Predicated region
        $region49: #{graph_sage_forward.1} parent=47 // pred_check
          %p290 = pneg %p117
        $region50: #{graph_sage_forward.1} parent=47 // pred_check_branch
          %292 = sbr.rel (%p290) target = $region52
        $region51: #{graph_sage_forward.1} parent=47 // pred_region
          %294 = dma.done [#allocation3], 2048
        $region52: #{graph_sage_forward.1} parent=47 // pred_fallthru
          _
        // Predicated region
        $region53: #{graph_sage_forward.1} parent=47 // pred_check
          %p295 = pneg %p159
        $region54: #{graph_sage_forward.1} parent=47 // pred_check_branch
          %297 = sbr.rel (%p295) target = $region56
        $region55: #{graph_sage_forward.1} parent=47 // pred_region
          %299 = dma.done [#allocation6], 4096
        $region56: #{graph_sage_forward.1} parent=47 // pred_fallthru
          _
        %p300 = scmp.lt.s32.totalorder %s23, 1
        %s301 = scalar_select %p300, %s23, 1
        %s302 = smul.addr %s301, 8
        %s303 = smul.addr %s302, 8
        %s304 = scalar_lea.vmem %s0, %s303
        %p305 = pneg %p44
        %p306 = pneg %p41
        %p307 = scmp.lt.s32.totalorder %s23, 1
        %s308 = scalar_select %p307, %s23, 1
        %s309 = smul.addr %s308, 8
        %s310 = smul.addr %s309, 8
        %s311 = scalar_lea.vmem %s1, %s310
        %p312 = pneg %p70
        %p313 = pneg %p67
        %p314 = scmp.lt.s32.totalorder %s23, 1
        %s315 = scalar_select %p314, %s23, 1
        %s316 = smul.addr %s315, 8
        %s317 = smul.addr %s316, 8
        %s318 = scalar_lea.vmem %s2, %s317
        %p319 = pneg %p96
        %p320 = pneg %p93
        %p321 = pneg %p117
        %p322 = pneg %p114
        %p323 = pneg %p138
        %p324 = pneg %p135
        %p325 = pneg %p159
        %p326 = pneg %p156
        %p327 = pneg %p180
        %p328 = pneg %p177
        %p329 = pneg %p206
        %p330 = pneg %p203
        %s331 = sand.u32 %s193, 1
        %s332 = scalar_lea.sflag [#allocation4], %s331
        %s333 = sand.u32 %s193, 1
        %s334 = smul.addr %s333, 64
        %s335 = scalar_lea.vmem [#allocation7], %s334
        %p336 = scmp.lt.s32.totalorder %s23, 1
        %s337 = scalar_select %p336, %s23, 1
        %s338 = smul.addr %s337, 8
        %s339 = smul.addr %s338, 8
        %s340 = scalar_lea.vmem %s0, %s339
        %p341 = scmp.lt.s32.totalorder %s23, 1
        %s342 = scalar_select %p341, %s23, 1
        %s343 = smul.addr %s342, 8
        %s344 = smul.addr %s343, 8
        %s345 = scalar_lea.vmem %s1, %s344
        %p346 = scmp.lt.s32.totalorder %s23, 1
        %s347 = scalar_select %p346, %s23, 1
        %s348 = smul.addr %s347, 8
        %s349 = smul.addr %s348, 8
        %s350 = scalar_lea.vmem %s2, %s349
        %v351 = vld [vmem:[#allocation2] sm:$0xff]
        %v352 = vld [vmem:[#allocation2 + $0x8] sm:$0xff]
        %v353 = vld [vmem:[#allocation2 + $0x10] sm:$0xff]
        %v354 = vld [vmem:[#allocation2 + $0x18] sm:$0xff]
        %v355 = vld [vmem:[#allocation2 + $0x20] sm:$0xff]
        %v356 = vld [vmem:[#allocation2 + $0x28] sm:$0xff]
        %v357 = vld [vmem:[#allocation2 + $0x30] sm:$0xff]
        %v358 = vld [vmem:[#allocation2 + $0x38] sm:$0xff]
        %v359 = vld [vmem:[#allocation2 + $0x40] sm:$0xff]
        %v360 = vld [vmem:[#allocation2 + $0x48] sm:$0xff]
        %v361 = vld [vmem:[#allocation2 + $0x50] sm:$0xff]
        %v362 = vld [vmem:[#allocation2 + $0x58] sm:$0xff]
        %v363 = vld [vmem:[#allocation2 + $0x60] sm:$0xff]
        %v364 = vld [vmem:[#allocation2 + $0x68] sm:$0xff]
        %v365 = vld [vmem:[#allocation2 + $0x70] sm:$0xff]
        %v366 = vld [vmem:[#allocation2 + $0x78] sm:$0xff]
        %v367 = vld [vmem:[%s4] sm:$0x1]
        %v368 = vld [vmem:[#allocation5] sm:$0xff]
        %v369 = vld [vmem:[#allocation5 + $0x8] sm:$0xff]
        %v370 = vld [vmem:[#allocation5 + $0x10] sm:$0xff]
        %v371 = vld [vmem:[#allocation5 + $0x18] sm:$0xff]
        %v372 = vld [vmem:[#allocation5 + $0x20] sm:$0xff]
        %v373 = vld [vmem:[#allocation5 + $0x28] sm:$0xff]
        %v374 = vld [vmem:[#allocation5 + $0x30] sm:$0xff]
        %v375 = vld [vmem:[#allocation5 + $0x38] sm:$0xff]
        %v376 = vld [vmem:[#allocation5 + $0x40] sm:$0xff]
        %v377 = vld [vmem:[#allocation5 + $0x48] sm:$0xff]
        %v378 = vld [vmem:[#allocation5 + $0x50] sm:$0xff]
        %v379 = vld [vmem:[#allocation5 + $0x58] sm:$0xff]
        %v380 = vld [vmem:[#allocation5 + $0x60] sm:$0xff]
        %v381 = vld [vmem:[#allocation5 + $0x68] sm:$0xff]
        %v382 = vld [vmem:[#allocation5 + $0x70] sm:$0xff]
        %v383 = vld [vmem:[#allocation5 + $0x78] sm:$0xff]
        %v384 = vld [vmem:[#allocation5 + $0x80] sm:$0xff]
        %v385 = vld [vmem:[#allocation5 + $0x88] sm:$0xff]
        %v386 = vld [vmem:[#allocation5 + $0x90] sm:$0xff]
        %v387 = vld [vmem:[#allocation5 + $0x98] sm:$0xff]
        %v388 = vld [vmem:[#allocation5 + $0xa0] sm:$0xff]
        %v389 = vld [vmem:[#allocation5 + $0xa8] sm:$0xff]
        %v390 = vld [vmem:[#allocation5 + $0xb0] sm:$0xff]
        %v391 = vld [vmem:[#allocation5 + $0xb8] sm:$0xff]
        %v392 = vld [vmem:[#allocation5 + $0xc0] sm:$0xff]
        %v393 = vld [vmem:[#allocation5 + $0xc8] sm:$0xff]
        %v394 = vld [vmem:[#allocation5 + $0xd0] sm:$0xff]
        %v395 = vld [vmem:[#allocation5 + $0xd8] sm:$0xff]
        %v396 = vld [vmem:[#allocation5 + $0xe0] sm:$0xff]
        %v397 = vld [vmem:[#allocation5 + $0xe8] sm:$0xff]
        %v398 = vld [vmem:[#allocation5 + $0xf0] sm:$0xff]
        %v399 = vld [vmem:[#allocation5 + $0xf8] sm:$0xff]
        %v400 = vld [vmem:[%s6] sm:$0x1]
        %v401 = vlaneseq
        %v402 = vand.u32 %v401, 127
        %v403 = vld [vmem:[%s345] sm:$0xff]
        %v404 = vld [vmem:[%s345 + $0x8] sm:$0xff]
        %v405 = vld [vmem:[%s345 + $0x10] sm:$0xff]
        %v406 = vld [vmem:[%s345 + $0x18] sm:$0xff]
        %v407 = vld [vmem:[%s345 + $0x20] sm:$0xff]
        %v408 = vld [vmem:[%s345 + $0x28] sm:$0xff]
        %v409 = vld [vmem:[%s345 + $0x30] sm:$0xff]
        %v410 = vld [vmem:[%s345 + $0x38] sm:$0xff]
        %v412 = vperm.slane %v367, 0
        %414 = vmatpush.msra.mxu0 %v366
        %415 = vmatpush.msra.mxu0 %v365
        %416 = vmatpush.msra.mxu0 %v364
        %417 = vmatpush.msra.mxu0 %v363
        %418 = vmatpush.msra.mxu0 %v362
        %419 = vmatpush.msra.mxu0 %v361
        %420 = vmatpush.msra.mxu0 %v360
        %421 = vmatpush.msra.mxu0 %v359
        %422 = vmatpush.msra.mxu0 %v358
        %423 = vmatpush.msra.mxu0 %v357
        %424 = vmatpush.msra.mxu0 %v356
        %425 = vmatpush.msra.mxu0 %v355
        %426 = vmatpush.msra.mxu0 %v354
        %427 = vmatpush.msra.mxu0 %v353
        %428 = vmatpush.msra.mxu0 %v352
        %429 = vmatpush.msra.mxu0 %v351
        %430 = vmatmul.f32.gmra.mxu0 %v403
        %v431 = vpop.f32.mrf.mxu0
        %v432 = vadd.f32 %v412, %v431
        %433 = vmatmul.f32.gmra.mxu0 %v404
        %v434 = vpop.f32.mrf.mxu0
        %v435 = vadd.f32 %v412, %v434
        %436 = vmatmul.f32.gmra.mxu0 %v405
        %v437 = vpop.f32.mrf.mxu0
        %v438 = vadd.f32 %v412, %v437
        %439 = vmatmul.f32.gmra.mxu0 %v406
        %v440 = vpop.f32.mrf.mxu0
        %v441 = vadd.f32 %v412, %v440
        %442 = vmatmul.f32.gmra.mxu0 %v407
        %v443 = vpop.f32.mrf.mxu0
        %v444 = vadd.f32 %v412, %v443
        %445 = vmatmul.f32.gmra.mxu0 %v408
        %v446 = vpop.f32.mrf.mxu0
        %v447 = vadd.f32 %v412, %v446
        %448 = vmatmul.f32.gmra.mxu0 %v409
        %v449 = vpop.f32.mrf.mxu0
        %v450 = vadd.f32 %v412, %v449
        %451 = vmatmul.f32.gmra.mxu0 %v410
        %v452 = vpop.f32.mrf.mxu0
        %v453 = vadd.f32 %v412, %v452
        %454 = vdwg.mxu0
        %v455 = vmul.f32 %v432, 0.5
        %v456 = vmul.f32 %v435, 0.5
        %v457 = vmul.f32 %v438, 0.5
        %v458 = vmul.f32 %v441, 0.5
        %v459 = vmul.f32 %v444, 0.5
        %v460 = vmul.f32 %v447, 0.5
        %v461 = vmul.f32 %v450, 0.5
        %v462 = vmul.f32 %v453, 0.5
        %v463 = vmul.f32 %v432, 0.044715
        %v464 = vmul.f32 %v435, 0.044715
        %v465 = vmul.f32 %v438, 0.044715
        %v466 = vmul.f32 %v441, 0.044715
        %v467 = vmul.f32 %v444, 0.044715
        %v468 = vmul.f32 %v447, 0.044715
        %v469 = vmul.f32 %v450, 0.044715
        %v470 = vmul.f32 %v453, 0.044715
        %v471 = vmul.f32 %v463, %v432
        %v472 = vmul.f32 %v464, %v435
        %v473 = vmul.f32 %v465, %v438
        %v474 = vmul.f32 %v466, %v441
        %v475 = vmul.f32 %v467, %v444
        %v476 = vmul.f32 %v468, %v447
        %v477 = vmul.f32 %v469, %v450
        %v478 = vmul.f32 %v470, %v453
        %v479 = vmul.f32 %v471, %v432
        %v480 = vmul.f32 %v472, %v435
        %v481 = vmul.f32 %v473, %v438
        %v482 = vmul.f32 %v474, %v441
        %v483 = vmul.f32 %v475, %v444
        %v484 = vmul.f32 %v476, %v447
        %v485 = vmul.f32 %v477, %v450
        %v486 = vmul.f32 %v478, %v453
        %v487 = vadd.f32 %v432, %v479
        %v488 = vadd.f32 %v435, %v480
        %v489 = vadd.f32 %v438, %v481
        %v490 = vadd.f32 %v441, %v482
        %v491 = vadd.f32 %v444, %v483
        %v492 = vadd.f32 %v447, %v484
        %v493 = vadd.f32 %v450, %v485
        %v494 = vadd.f32 %v453, %v486
        %v495 = vmul.f32 %v487, 0.7978846
        %v496 = vmul.f32 %v488, 0.7978846
        %v497 = vmul.f32 %v489, 0.7978846
        %v498 = vmul.f32 %v490, 0.7978846
        %v499 = vmul.f32 %v491, 0.7978846
        %v500 = vmul.f32 %v492, 0.7978846
        %v501 = vmul.f32 %v493, 0.7978846
        %v502 = vmul.f32 %v494, 0.7978846
        %v503 = vtanh.pop %v495
        %v504 = vtanh.pop %v496
        %v505 = vtanh.pop %v497
        %v506 = vtanh.pop %v498
        %v507 = vtanh.pop %v499
        %v508 = vtanh.pop %v500
        %v509 = vtanh.pop %v501
        %v510 = vtanh.pop %v502
        %v511 = vadd.f32 %v503, 1.0
        %v512 = vadd.f32 %v504, 1.0
        %v513 = vadd.f32 %v505, 1.0
        %v514 = vadd.f32 %v506, 1.0
        %v515 = vadd.f32 %v507, 1.0
        %v516 = vadd.f32 %v508, 1.0
        %v517 = vadd.f32 %v509, 1.0
        %v518 = vadd.f32 %v510, 1.0
        %v519 = vmul.f32 %v455, %v511
        %v520 = vmul.f32 %v456, %v512
        %v521 = vmul.f32 %v457, %v513
        %v522 = vmul.f32 %v458, %v514
        %v523 = vmul.f32 %v459, %v515
        %v524 = vmul.f32 %v460, %v516
        %v525 = vmul.f32 %v461, %v517
        %v526 = vmul.f32 %v462, %v518
        %v527 = vld [vmem:[%s350] sm:$0xff]
        %v528 = vld [vmem:[%s350 + $0x8] sm:$0xff]
        %v529 = vld [vmem:[%s350 + $0x10] sm:$0xff]
        %v530 = vld [vmem:[%s350 + $0x18] sm:$0xff]
        %v531 = vld [vmem:[%s350 + $0x20] sm:$0xff]
        %v532 = vld [vmem:[%s350 + $0x28] sm:$0xff]
        %v533 = vld [vmem:[%s350 + $0x30] sm:$0xff]
        %v534 = vld [vmem:[%s350 + $0x38] sm:$0xff]
        %535 = vset.pattern.permute.xlu0 0
        %536 = vperm.xlu0 %535, %v527
        %v537 = vpop.permute.xlu0 %536
        %538 = vset.pattern.permute.xlu0 0
        %539 = vperm.xlu0 %538, %v528
        %v540 = vpop.permute.xlu0 %539
        %541 = vset.pattern.permute.xlu0 0
        %542 = vperm.xlu0 %541, %v529
        %v543 = vpop.permute.xlu0 %542
        %544 = vset.pattern.permute.xlu0 0
        %545 = vperm.xlu0 %544, %v530
        %v546 = vpop.permute.xlu0 %545
        %547 = vset.pattern.permute.xlu0 0
        %548 = vperm.xlu0 %547, %v531
        %v549 = vpop.permute.xlu0 %548
        %550 = vset.pattern.permute.xlu0 0
        %551 = vperm.xlu0 %550, %v532
        %v552 = vpop.permute.xlu0 %551
        %553 = vset.pattern.permute.xlu0 0
        %554 = vperm.xlu0 %553, %v533
        %v555 = vpop.permute.xlu0 %554
        %556 = vset.pattern.permute.xlu0 0
        %557 = vperm.xlu0 %556, %v534
        %v558 = vpop.permute.xlu0 %557
        %vm559 = vcmp.eq.s32.totalorder %v402, %v537
        %vm560 = vcmp.eq.s32.totalorder %v402, %v540
        %vm561 = vcmp.eq.s32.totalorder %v402, %v543
        %vm562 = vcmp.eq.s32.totalorder %v402, %v546
        %vm563 = vcmp.eq.s32.totalorder %v402, %v549
        %vm564 = vcmp.eq.s32.totalorder %v402, %v552
        %vm565 = vcmp.eq.s32.totalorder %v402, %v555
        %vm566 = vcmp.eq.s32.totalorder %v402, %v558
        %v567 = vsel %vm559, 1, 0
        %v568 = vsel %vm560, 1, 0
        %v569 = vsel %vm561, 1, 0
        %v570 = vsel %vm562, 1, 0
        %v571 = vsel %vm563, 1, 0
        %v572 = vsel %vm564, 1, 0
        %v573 = vsel %vm565, 1, 0
        %v574 = vsel %vm566, 1, 0
        %v575 = vcvt.s32.f32 %v567
        %v576 = vcvt.s32.f32 %v568
        %v577 = vcvt.s32.f32 %v569
        %v578 = vcvt.s32.f32 %v570
        %v579 = vcvt.s32.f32 %v571
        %v580 = vcvt.s32.f32 %v572
        %v581 = vcvt.s32.f32 %v573
        %v582 = vcvt.s32.f32 %v574
        %583 = vset.pattern.permute.xlu0 1
        %584 = vperm.xlu0 %583, %v527
        %v585 = vpop.permute.xlu0 %584
        %586 = vset.pattern.permute.xlu0 1
        %587 = vperm.xlu0 %586, %v528
        %v588 = vpop.permute.xlu0 %587
        %589 = vset.pattern.permute.xlu0 1
        %590 = vperm.xlu0 %589, %v529
        %v591 = vpop.permute.xlu0 %590
        %592 = vset.pattern.permute.xlu0 1
        %593 = vperm.xlu0 %592, %v530
        %v594 = vpop.permute.xlu0 %593
        %595 = vset.pattern.permute.xlu0 1
        %596 = vperm.xlu0 %595, %v531
        %v597 = vpop.permute.xlu0 %596
        %598 = vset.pattern.permute.xlu0 1
        %599 = vperm.xlu0 %598, %v532
        %v600 = vpop.permute.xlu0 %599
        %601 = vset.pattern.permute.xlu0 1
        %602 = vperm.xlu0 %601, %v533
        %v603 = vpop.permute.xlu0 %602
        %604 = vset.pattern.permute.xlu0 1
        %605 = vperm.xlu0 %604, %v534
        %v606 = vpop.permute.xlu0 %605
        %vm607 = vcmp.eq.s32.totalorder %v402, %v585
        %vm608 = vcmp.eq.s32.totalorder %v402, %v588
        %vm609 = vcmp.eq.s32.totalorder %v402, %v591
        %vm610 = vcmp.eq.s32.totalorder %v402, %v594
        %vm611 = vcmp.eq.s32.totalorder %v402, %v597
        %vm612 = vcmp.eq.s32.totalorder %v402, %v600
        %vm613 = vcmp.eq.s32.totalorder %v402, %v603
        %vm614 = vcmp.eq.s32.totalorder %v402, %v606
        %v615 = vsel %vm607, 1, 0
        %v616 = vsel %vm608, 1, 0
        %v617 = vsel %vm609, 1, 0
        %v618 = vsel %vm610, 1, 0
        %v619 = vsel %vm611, 1, 0
        %v620 = vsel %vm612, 1, 0
        %v621 = vsel %vm613, 1, 0
        %v622 = vsel %vm614, 1, 0
        %v623 = vcvt.s32.f32 %v615
        %v624 = vcvt.s32.f32 %v616
        %v625 = vcvt.s32.f32 %v617
        %v626 = vcvt.s32.f32 %v618
        %v627 = vcvt.s32.f32 %v619
        %v628 = vcvt.s32.f32 %v620
        %v629 = vcvt.s32.f32 %v621
        %v630 = vcvt.s32.f32 %v622
        %631 = vset.pattern.permute.xlu0 2
        %632 = vperm.xlu0 %631, %v527
        %v633 = vpop.permute.xlu0 %632
        %634 = vset.pattern.permute.xlu0 2
        %635 = vperm.xlu0 %634, %v528
        %v636 = vpop.permute.xlu0 %635
        %637 = vset.pattern.permute.xlu0 2
        %638 = vperm.xlu0 %637, %v529
        %v639 = vpop.permute.xlu0 %638
        %640 = vset.pattern.permute.xlu0 2
        %641 = vperm.xlu0 %640, %v530
        %v642 = vpop.permute.xlu0 %641
        %643 = vset.pattern.permute.xlu0 2
        %644 = vperm.xlu0 %643, %v531
        %v645 = vpop.permute.xlu0 %644
        %646 = vset.pattern.permute.xlu0 2
        %647 = vperm.xlu0 %646, %v532
        %v648 = vpop.permute.xlu0 %647
        %649 = vset.pattern.permute.xlu0 2
        %650 = vperm.xlu0 %649, %v533
        %v651 = vpop.permute.xlu0 %650
        %652 = vset.pattern.permute.xlu0 2
        %653 = vperm.xlu0 %652, %v534
        %v654 = vpop.permute.xlu0 %653
        %vm655 = vcmp.eq.s32.totalorder %v402, %v633
        %vm656 = vcmp.eq.s32.totalorder %v402, %v636
        %vm657 = vcmp.eq.s32.totalorder %v402, %v639
        %vm658 = vcmp.eq.s32.totalorder %v402, %v642
        %vm659 = vcmp.eq.s32.totalorder %v402, %v645
        %vm660 = vcmp.eq.s32.totalorder %v402, %v648
        %vm661 = vcmp.eq.s32.totalorder %v402, %v651
        %vm662 = vcmp.eq.s32.totalorder %v402, %v654
        %v663 = vsel %vm655, 1, 0
        %v664 = vsel %vm656, 1, 0
        %v665 = vsel %vm657, 1, 0
        %v666 = vsel %vm658, 1, 0
        %v667 = vsel %vm659, 1, 0
        %v668 = vsel %vm660, 1, 0
        %v669 = vsel %vm661, 1, 0
        %v670 = vsel %vm662, 1, 0
        %v671 = vcvt.s32.f32 %v663
        %v672 = vcvt.s32.f32 %v664
        %v673 = vcvt.s32.f32 %v665
        %v674 = vcvt.s32.f32 %v666
        %v675 = vcvt.s32.f32 %v667
        %v676 = vcvt.s32.f32 %v668
        %v677 = vcvt.s32.f32 %v669
        %v678 = vcvt.s32.f32 %v670
        %679 = vset.pattern.permute.xlu0 3
        %680 = vperm.xlu0 %679, %v527
        %v681 = vpop.permute.xlu0 %680
        %682 = vset.pattern.permute.xlu0 3
        %683 = vperm.xlu0 %682, %v528
        %v684 = vpop.permute.xlu0 %683
        %685 = vset.pattern.permute.xlu0 3
        %686 = vperm.xlu0 %685, %v529
        %v687 = vpop.permute.xlu0 %686
        %688 = vset.pattern.permute.xlu0 3
        %689 = vperm.xlu0 %688, %v530
        %v690 = vpop.permute.xlu0 %689
        %691 = vset.pattern.permute.xlu0 3
        %692 = vperm.xlu0 %691, %v531
        %v693 = vpop.permute.xlu0 %692
        %694 = vset.pattern.permute.xlu0 3
        %695 = vperm.xlu0 %694, %v532
        %v696 = vpop.permute.xlu0 %695
        %697 = vset.pattern.permute.xlu0 3
        %698 = vperm.xlu0 %697, %v533
        %v699 = vpop.permute.xlu0 %698
        %700 = vset.pattern.permute.xlu0 3
        %701 = vperm.xlu0 %700, %v534
        %v702 = vpop.permute.xlu0 %701
        %vm703 = vcmp.eq.s32.totalorder %v402, %v681
        %vm704 = vcmp.eq.s32.totalorder %v402, %v684
        %vm705 = vcmp.eq.s32.totalorder %v402, %v687
        %vm706 = vcmp.eq.s32.totalorder %v402, %v690
        %vm707 = vcmp.eq.s32.totalorder %v402, %v693
        %vm708 = vcmp.eq.s32.totalorder %v402, %v696
        %vm709 = vcmp.eq.s32.totalorder %v402, %v699
        %vm710 = vcmp.eq.s32.totalorder %v402, %v702
        %v711 = vsel %vm703, 1, 0
        %v712 = vsel %vm704, 1, 0
        %v713 = vsel %vm705, 1, 0
        %v714 = vsel %vm706, 1, 0
        %v715 = vsel %vm707, 1, 0
        %v716 = vsel %vm708, 1, 0
        %v717 = vsel %vm709, 1, 0
        %v718 = vsel %vm710, 1, 0
        %v719 = vcvt.s32.f32 %v711
        %v720 = vcvt.s32.f32 %v712
        %v721 = vcvt.s32.f32 %v713
        %v722 = vcvt.s32.f32 %v714
        %v723 = vcvt.s32.f32 %v715
        %v724 = vcvt.s32.f32 %v716
        %v725 = vcvt.s32.f32 %v717
        %v726 = vcvt.s32.f32 %v718
        %727 = vset.pattern.permute.xlu0 4
        %728 = vperm.xlu0 %727, %v527
        %v729 = vpop.permute.xlu0 %728
        %730 = vset.pattern.permute.xlu0 4
        %731 = vperm.xlu0 %730, %v528
        %v732 = vpop.permute.xlu0 %731
        %733 = vset.pattern.permute.xlu0 4
        %734 = vperm.xlu0 %733, %v529
        %v735 = vpop.permute.xlu0 %734
        %736 = vset.pattern.permute.xlu0 4
        %737 = vperm.xlu0 %736, %v530
        %v738 = vpop.permute.xlu0 %737
        %739 = vset.pattern.permute.xlu0 4
        %740 = vperm.xlu0 %739, %v531
        %v741 = vpop.permute.xlu0 %740
        %742 = vset.pattern.permute.xlu0 4
        %743 = vperm.xlu0 %742, %v532
        %v744 = vpop.permute.xlu0 %743
        %745 = vset.pattern.permute.xlu0 4
        %746 = vperm.xlu0 %745, %v533
        %v747 = vpop.permute.xlu0 %746
        %748 = vset.pattern.permute.xlu0 4
        %749 = vperm.xlu0 %748, %v534
        %v750 = vpop.permute.xlu0 %749
        %vm751 = vcmp.eq.s32.totalorder %v402, %v729
        %vm752 = vcmp.eq.s32.totalorder %v402, %v732
        %vm753 = vcmp.eq.s32.totalorder %v402, %v735
        %vm754 = vcmp.eq.s32.totalorder %v402, %v738
        %vm755 = vcmp.eq.s32.totalorder %v402, %v741
        %vm756 = vcmp.eq.s32.totalorder %v402, %v744
        %vm757 = vcmp.eq.s32.totalorder %v402, %v747
        %vm758 = vcmp.eq.s32.totalorder %v402, %v750
        %v759 = vsel %vm751, 1, 0
        %v760 = vsel %vm752, 1, 0
        %v761 = vsel %vm753, 1, 0
        %v762 = vsel %vm754, 1, 0
        %v763 = vsel %vm755, 1, 0
        %v764 = vsel %vm756, 1, 0
        %v765 = vsel %vm757, 1, 0
        %v766 = vsel %vm758, 1, 0
        %v767 = vcvt.s32.f32 %v759
        %v768 = vcvt.s32.f32 %v760
        %v769 = vcvt.s32.f32 %v761
        %v770 = vcvt.s32.f32 %v762
        %v771 = vcvt.s32.f32 %v763
        %v772 = vcvt.s32.f32 %v764
        %v773 = vcvt.s32.f32 %v765
        %v774 = vcvt.s32.f32 %v766
        %775 = vset.pattern.permute.xlu0 5
        %776 = vperm.xlu0 %775, %v527
        %v777 = vpop.permute.xlu0 %776
        %778 = vset.pattern.permute.xlu0 5
        %779 = vperm.xlu0 %778, %v528
        %v780 = vpop.permute.xlu0 %779
        %781 = vset.pattern.permute.xlu0 5
        %782 = vperm.xlu0 %781, %v529
        %v783 = vpop.permute.xlu0 %782
        %784 = vset.pattern.permute.xlu0 5
        %785 = vperm.xlu0 %784, %v530
        %v786 = vpop.permute.xlu0 %785
        %787 = vset.pattern.permute.xlu0 5
        %788 = vperm.xlu0 %787, %v531
        %v789 = vpop.permute.xlu0 %788
        %790 = vset.pattern.permute.xlu0 5
        %791 = vperm.xlu0 %790, %v532
        %v792 = vpop.permute.xlu0 %791
        %793 = vset.pattern.permute.xlu0 5
        %794 = vperm.xlu0 %793, %v533
        %v795 = vpop.permute.xlu0 %794
        %796 = vset.pattern.permute.xlu0 5
        %797 = vperm.xlu0 %796, %v534
        %v798 = vpop.permute.xlu0 %797
        %vm799 = vcmp.eq.s32.totalorder %v402, %v777
        %vm800 = vcmp.eq.s32.totalorder %v402, %v780
        %vm801 = vcmp.eq.s32.totalorder %v402, %v783
        %vm802 = vcmp.eq.s32.totalorder %v402, %v786
        %vm803 = vcmp.eq.s32.totalorder %v402, %v789
        %vm804 = vcmp.eq.s32.totalorder %v402, %v792
        %vm805 = vcmp.eq.s32.totalorder %v402, %v795
        %vm806 = vcmp.eq.s32.totalorder %v402, %v798
        %v807 = vsel %vm799, 1, 0
        %v808 = vsel %vm800, 1, 0
        %v809 = vsel %vm801, 1, 0
        %v810 = vsel %vm802, 1, 0
        %v811 = vsel %vm803, 1, 0
        %v812 = vsel %vm804, 1, 0
        %v813 = vsel %vm805, 1, 0
        %v814 = vsel %vm806, 1, 0
        %v815 = vcvt.s32.f32 %v807
        %v816 = vcvt.s32.f32 %v808
        %v817 = vcvt.s32.f32 %v809
        %v818 = vcvt.s32.f32 %v810
        %v819 = vcvt.s32.f32 %v811
        %v820 = vcvt.s32.f32 %v812
        %v821 = vcvt.s32.f32 %v813
        %v822 = vcvt.s32.f32 %v814
        %823 = vset.pattern.permute.xlu0 6
        %824 = vperm.xlu0 %823, %v527
        %v825 = vpop.permute.xlu0 %824
        %826 = vset.pattern.permute.xlu0 6
        %827 = vperm.xlu0 %826, %v528
        %v828 = vpop.permute.xlu0 %827
        %829 = vset.pattern.permute.xlu0 6
        %830 = vperm.xlu0 %829, %v529
        %v831 = vpop.permute.xlu0 %830
        %832 = vset.pattern.permute.xlu0 6
        %833 = vperm.xlu0 %832, %v530
        %v834 = vpop.permute.xlu0 %833
        %835 = vset.pattern.permute.xlu0 6
        %836 = vperm.xlu0 %835, %v531
        %v837 = vpop.permute.xlu0 %836
        %838 = vset.pattern.permute.xlu0 6
        %839 = vperm.xlu0 %838, %v532
        %v840 = vpop.permute.xlu0 %839
        %841 = vset.pattern.permute.xlu0 6
        %842 = vperm.xlu0 %841, %v533
        %v843 = vpop.permute.xlu0 %842
        %844 = vset.pattern.permute.xlu0 6
        %845 = vperm.xlu0 %844, %v534
        %v846 = vpop.permute.xlu0 %845
        %vm847 = vcmp.eq.s32.totalorder %v402, %v825
        %vm848 = vcmp.eq.s32.totalorder %v402, %v828
        %vm849 = vcmp.eq.s32.totalorder %v402, %v831
        %vm850 = vcmp.eq.s32.totalorder %v402, %v834
        %vm851 = vcmp.eq.s32.totalorder %v402, %v837
        %vm852 = vcmp.eq.s32.totalorder %v402, %v840
        %vm853 = vcmp.eq.s32.totalorder %v402, %v843
        %vm854 = vcmp.eq.s32.totalorder %v402, %v846
        %v855 = vsel %vm847, 1, 0
        %v856 = vsel %vm848, 1, 0
        %v857 = vsel %vm849, 1, 0
        %v858 = vsel %vm850, 1, 0
        %v859 = vsel %vm851, 1, 0
        %v860 = vsel %vm852, 1, 0
        %v861 = vsel %vm853, 1, 0
        %v862 = vsel %vm854, 1, 0
        %v863 = vcvt.s32.f32 %v855
        %v864 = vcvt.s32.f32 %v856
        %v865 = vcvt.s32.f32 %v857
        %v866 = vcvt.s32.f32 %v858
        %v867 = vcvt.s32.f32 %v859
        %v868 = vcvt.s32.f32 %v860
        %v869 = vcvt.s32.f32 %v861
        %v870 = vcvt.s32.f32 %v862
        %871 = vset.pattern.permute.xlu0 7
        %872 = vperm.xlu0 %871, %v527
        %v873 = vpop.permute.xlu0 %872
        %874 = vset.pattern.permute.xlu0 7
        %875 = vperm.xlu0 %874, %v528
        %v876 = vpop.permute.xlu0 %875
        %877 = vset.pattern.permute.xlu0 7
        %878 = vperm.xlu0 %877, %v529
        %v879 = vpop.permute.xlu0 %878
        %880 = vset.pattern.permute.xlu0 7
        %881 = vperm.xlu0 %880, %v530
        %v882 = vpop.permute.xlu0 %881
        %883 = vset.pattern.permute.xlu0 7
        %884 = vperm.xlu0 %883, %v531
        %v885 = vpop.permute.xlu0 %884
        %886 = vset.pattern.permute.xlu0 7
        %887 = vperm.xlu0 %886, %v532
        %v888 = vpop.permute.xlu0 %887
        %889 = vset.pattern.permute.xlu0 7
        %890 = vperm.xlu0 %889, %v533
        %v891 = vpop.permute.xlu0 %890
        %892 = vset.pattern.permute.xlu0 7
        %893 = vperm.xlu0 %892, %v534
        %v894 = vpop.permute.xlu0 %893
        %vm895 = vcmp.eq.s32.totalorder %v402, %v873
        %vm896 = vcmp.eq.s32.totalorder %v402, %v876
        %vm897 = vcmp.eq.s32.totalorder %v402, %v879
        %vm898 = vcmp.eq.s32.totalorder %v402, %v882
        %vm899 = vcmp.eq.s32.totalorder %v402, %v885
        %vm900 = vcmp.eq.s32.totalorder %v402, %v888
        %vm901 = vcmp.eq.s32.totalorder %v402, %v891
        %vm902 = vcmp.eq.s32.totalorder %v402, %v894
        %v903 = vsel %vm895, 1, 0
        %v904 = vsel %vm896, 1, 0
        %v905 = vsel %vm897, 1, 0
        %v906 = vsel %vm898, 1, 0
        %v907 = vsel %vm899, 1, 0
        %v908 = vsel %vm900, 1, 0
        %v909 = vsel %vm901, 1, 0
        %v910 = vsel %vm902, 1, 0
        %v911 = vcvt.s32.f32 %v903
        %v912 = vcvt.s32.f32 %v904
        %v913 = vcvt.s32.f32 %v905
        %v914 = vcvt.s32.f32 %v906
        %v915 = vcvt.s32.f32 %v907
        %v916 = vcvt.s32.f32 %v908
        %v917 = vcvt.s32.f32 %v909
        %v918 = vcvt.s32.f32 %v910
        %vm919 = vcmask 523264
        %v921 = vsel %vm919, %v575, 0
        %v924 = vsel %vm919, %v576, 0
        %v927 = vsel %vm919, %v577, 0
        %v930 = vsel %vm919, %v578, 0
        %v933 = vsel %vm919, %v579, 0
        %v936 = vsel %vm919, %v580, 0
        %v939 = vsel %vm919, %v581, 0
        %v942 = vsel %vm919, %v582, 0
        %v945 = vsel %vm919, %v623, 0
        %v948 = vsel %vm919, %v624, 0
        %v951 = vsel %vm919, %v625, 0
        %v954 = vsel %vm919, %v626, 0
        %v957 = vsel %vm919, %v627, 0
        %v960 = vsel %vm919, %v628, 0
        %v963 = vsel %vm919, %v629, 0
        %v966 = vsel %vm919, %v630, 0
        %v969 = vsel %vm919, %v671, 0
        %v972 = vsel %vm919, %v672, 0
        %v975 = vsel %vm919, %v673, 0
        %v978 = vsel %vm919, %v674, 0
        %v981 = vsel %vm919, %v675, 0
        %v984 = vsel %vm919, %v676, 0
        %v987 = vsel %vm919, %v677, 0
        %v990 = vsel %vm919, %v678, 0
        %v993 = vsel %vm919, %v719, 0
        %v996 = vsel %vm919, %v720, 0
        %v999 = vsel %vm919, %v721, 0
        %v1002 = vsel %vm919, %v722, 0
        %v1005 = vsel %vm919, %v723, 0
        %v1008 = vsel %vm919, %v724, 0
        %v1011 = vsel %vm919, %v725, 0
        %v1014 = vsel %vm919, %v726, 0
        %v1017 = vsel %vm919, %v767, 0
        %v1020 = vsel %vm919, %v768, 0
        %v1023 = vsel %vm919, %v769, 0
        %v1026 = vsel %vm919, %v770, 0
        %v1029 = vsel %vm919, %v771, 0
        %v1032 = vsel %vm919, %v772, 0
        %v1035 = vsel %vm919, %v773, 0
        %v1038 = vsel %vm919, %v774, 0
        %v1041 = vsel %vm919, %v815, 0
        %v1044 = vsel %vm919, %v816, 0
        %v1047 = vsel %vm919, %v817, 0
        %v1050 = vsel %vm919, %v818, 0
        %v1053 = vsel %vm919, %v819, 0
        %v1056 = vsel %vm919, %v820, 0
        %v1059 = vsel %vm919, %v821, 0
        %v1062 = vsel %vm919, %v822, 0
        %v1065 = vsel %vm919, %v863, 0
        %v1068 = vsel %vm919, %v864, 0
        %v1071 = vsel %vm919, %v865, 0
        %v1074 = vsel %vm919, %v866, 0
        %v1077 = vsel %vm919, %v867, 0
        %v1080 = vsel %vm919, %v868, 0
        %v1083 = vsel %vm919, %v869, 0
        %v1086 = vsel %vm919, %v870, 0
        %v1089 = vsel %vm919, %v911, 0
        %v1092 = vsel %vm919, %v912, 0
        %v1095 = vsel %vm919, %v913, 0
        %v1098 = vsel %vm919, %v914, 0
        %v1101 = vsel %vm919, %v915, 0
        %v1104 = vsel %vm919, %v916, 0
        %v1107 = vsel %vm919, %v917, 0
        %v1110 = vsel %vm919, %v918, 0
        %1112 = vmatpush.msra.mxu0 0.0
        %1113 = vmatpush.msra.mxu0 0.0
        %1114 = vmatpush.msra.mxu0 0.0
        %1115 = vmatpush.msra.mxu0 0.0
        %1116 = vmatpush.msra.mxu0 0.0
        %1117 = vmatpush.msra.mxu0 0.0
        %1118 = vmatpush.msra.mxu0 0.0
        %1119 = vmatpush.msra.mxu0 0.0
        %1120 = vmatpush.msra.mxu0 %v526
        %1121 = vmatpush.msra.mxu0 %v525
        %1122 = vmatpush.msra.mxu0 %v524
        %1123 = vmatpush.msra.mxu0 %v523
        %1124 = vmatpush.msra.mxu0 %v522
        %1125 = vmatpush.msra.mxu0 %v521
        %1126 = vmatpush.msra.mxu0 %v520
        %1127 = vmatpush.msra.mxu0 %v519
        %1128 = vmatmul.f32.gmra.mxu0 %v921
        %v1129 = vpop.f32.mrf.mxu0
        %v1130 = vadd.f32 0.0, %v1129
        %1131 = vmatmul.f32.gmra.mxu0 %v924
        %v1132 = vpop.f32.mrf.mxu0
        %v1133 = vadd.f32 0.0, %v1132
        %1134 = vmatmul.f32.gmra.mxu0 %v927
        %v1135 = vpop.f32.mrf.mxu0
        %v1136 = vadd.f32 0.0, %v1135
        %1137 = vmatmul.f32.gmra.mxu0 %v930
        %v1138 = vpop.f32.mrf.mxu0
        %v1139 = vadd.f32 0.0, %v1138
        %1140 = vmatmul.f32.gmra.mxu0 %v933
        %v1141 = vpop.f32.mrf.mxu0
        %v1142 = vadd.f32 0.0, %v1141
        %1143 = vmatmul.f32.gmra.mxu0 %v936
        %v1144 = vpop.f32.mrf.mxu0
        %v1145 = vadd.f32 0.0, %v1144
        %1146 = vmatmul.f32.gmra.mxu0 %v939
        %v1147 = vpop.f32.mrf.mxu0
        %v1148 = vadd.f32 0.0, %v1147
        %1149 = vmatmul.f32.gmra.mxu0 %v942
        %v1150 = vpop.f32.mrf.mxu0
        %v1151 = vadd.f32 0.0, %v1150
        %1152 = vmatmul.f32.gmra.mxu0 %v945
        %v1153 = vpop.f32.mrf.mxu0
        %v1154 = vadd.f32 0.0, %v1153
        %1155 = vmatmul.f32.gmra.mxu0 %v948
        %v1156 = vpop.f32.mrf.mxu0
        %v1157 = vadd.f32 0.0, %v1156
        %1158 = vmatmul.f32.gmra.mxu0 %v951
        %v1159 = vpop.f32.mrf.mxu0
        %v1160 = vadd.f32 0.0, %v1159
        %1161 = vmatmul.f32.gmra.mxu0 %v954
        %v1162 = vpop.f32.mrf.mxu0
        %v1163 = vadd.f32 0.0, %v1162
        %1164 = vmatmul.f32.gmra.mxu0 %v957
        %v1165 = vpop.f32.mrf.mxu0
        %v1166 = vadd.f32 0.0, %v1165
        %1167 = vmatmul.f32.gmra.mxu0 %v960
        %v1168 = vpop.f32.mrf.mxu0
        %v1169 = vadd.f32 0.0, %v1168
        %1170 = vmatmul.f32.gmra.mxu0 %v963
        %v1171 = vpop.f32.mrf.mxu0
        %v1172 = vadd.f32 0.0, %v1171
        %1173 = vmatmul.f32.gmra.mxu0 %v966
        %v1174 = vpop.f32.mrf.mxu0
        %v1175 = vadd.f32 0.0, %v1174
        %1176 = vmatmul.f32.gmra.mxu0 %v969
        %v1177 = vpop.f32.mrf.mxu0
        %v1178 = vadd.f32 0.0, %v1177
        %1179 = vmatmul.f32.gmra.mxu0 %v972
        %v1180 = vpop.f32.mrf.mxu0
        %v1181 = vadd.f32 0.0, %v1180
        %1182 = vmatmul.f32.gmra.mxu0 %v975
        %v1183 = vpop.f32.mrf.mxu0
        %v1184 = vadd.f32 0.0, %v1183
        %1185 = vmatmul.f32.gmra.mxu0 %v978
        %v1186 = vpop.f32.mrf.mxu0
        %v1187 = vadd.f32 0.0, %v1186
        %1188 = vmatmul.f32.gmra.mxu0 %v981
        %v1189 = vpop.f32.mrf.mxu0
        %v1190 = vadd.f32 0.0, %v1189
        %1191 = vmatmul.f32.gmra.mxu0 %v984
        %v1192 = vpop.f32.mrf.mxu0
        %v1193 = vadd.f32 0.0, %v1192
        %1194 = vmatmul.f32.gmra.mxu0 %v987
        %v1195 = vpop.f32.mrf.mxu0
        %v1196 = vadd.f32 0.0, %v1195
        %1197 = vmatmul.f32.gmra.mxu0 %v990
        %v1198 = vpop.f32.mrf.mxu0
        %v1199 = vadd.f32 0.0, %v1198
        %1200 = vmatmul.f32.gmra.mxu0 %v993
        %v1201 = vpop.f32.mrf.mxu0
        %v1202 = vadd.f32 0.0, %v1201
        %1203 = vmatmul.f32.gmra.mxu0 %v996
        %v1204 = vpop.f32.mrf.mxu0
        %v1205 = vadd.f32 0.0, %v1204
        %1206 = vmatmul.f32.gmra.mxu0 %v999
        %v1207 = vpop.f32.mrf.mxu0
        %v1208 = vadd.f32 0.0, %v1207
        %1209 = vmatmul.f32.gmra.mxu0 %v1002
        %v1210 = vpop.f32.mrf.mxu0
        %v1211 = vadd.f32 0.0, %v1210
        %1212 = vmatmul.f32.gmra.mxu0 %v1005
        %v1213 = vpop.f32.mrf.mxu0
        %v1214 = vadd.f32 0.0, %v1213
        %1215 = vmatmul.f32.gmra.mxu0 %v1008
        %v1216 = vpop.f32.mrf.mxu0
        %v1217 = vadd.f32 0.0, %v1216
        %1218 = vmatmul.f32.gmra.mxu0 %v1011
        %v1219 = vpop.f32.mrf.mxu0
        %v1220 = vadd.f32 0.0, %v1219
        %1221 = vmatmul.f32.gmra.mxu0 %v1014
        %v1222 = vpop.f32.mrf.mxu0
        %v1223 = vadd.f32 0.0, %v1222
        %1224 = vmatmul.f32.gmra.mxu0 %v1017
        %v1225 = vpop.f32.mrf.mxu0
        %v1226 = vadd.f32 0.0, %v1225
        %1227 = vmatmul.f32.gmra.mxu0 %v1020
        %v1228 = vpop.f32.mrf.mxu0
        %v1229 = vadd.f32 0.0, %v1228
        %1230 = vmatmul.f32.gmra.mxu0 %v1023
        %v1231 = vpop.f32.mrf.mxu0
        %v1232 = vadd.f32 0.0, %v1231
        %1233 = vmatmul.f32.gmra.mxu0 %v1026
        %v1234 = vpop.f32.mrf.mxu0
        %v1235 = vadd.f32 0.0, %v1234
        %1236 = vmatmul.f32.gmra.mxu0 %v1029
        %v1237 = vpop.f32.mrf.mxu0
        %v1238 = vadd.f32 0.0, %v1237
        %1239 = vmatmul.f32.gmra.mxu0 %v1032
        %v1240 = vpop.f32.mrf.mxu0
        %v1241 = vadd.f32 0.0, %v1240
        %1242 = vmatmul.f32.gmra.mxu0 %v1035
        %v1243 = vpop.f32.mrf.mxu0
        %v1244 = vadd.f32 0.0, %v1243
        %1245 = vmatmul.f32.gmra.mxu0 %v1038
        %v1246 = vpop.f32.mrf.mxu0
        %v1247 = vadd.f32 0.0, %v1246
        %1248 = vmatmul.f32.gmra.mxu0 %v1041
        %v1249 = vpop.f32.mrf.mxu0
        %v1250 = vadd.f32 0.0, %v1249
        %1251 = vmatmul.f32.gmra.mxu0 %v1044
        %v1252 = vpop.f32.mrf.mxu0
        %v1253 = vadd.f32 0.0, %v1252
        %1254 = vmatmul.f32.gmra.mxu0 %v1047
        %v1255 = vpop.f32.mrf.mxu0
        %v1256 = vadd.f32 0.0, %v1255
        %1257 = vmatmul.f32.gmra.mxu0 %v1050
        %v1258 = vpop.f32.mrf.mxu0
        %v1259 = vadd.f32 0.0, %v1258
        %1260 = vmatmul.f32.gmra.mxu0 %v1053
        %v1261 = vpop.f32.mrf.mxu0
        %v1262 = vadd.f32 0.0, %v1261
        %1263 = vmatmul.f32.gmra.mxu0 %v1056
        %v1264 = vpop.f32.mrf.mxu0
        %v1265 = vadd.f32 0.0, %v1264
        %1266 = vmatmul.f32.gmra.mxu0 %v1059
        %v1267 = vpop.f32.mrf.mxu0
        %v1268 = vadd.f32 0.0, %v1267
        %1269 = vmatmul.f32.gmra.mxu0 %v1062
        %v1270 = vpop.f32.mrf.mxu0
        %v1271 = vadd.f32 0.0, %v1270
        %1272 = vmatmul.f32.gmra.mxu0 %v1065
        %v1273 = vpop.f32.mrf.mxu0
        %v1274 = vadd.f32 0.0, %v1273
        %1275 = vmatmul.f32.gmra.mxu0 %v1068
        %v1276 = vpop.f32.mrf.mxu0
        %v1277 = vadd.f32 0.0, %v1276
        %1278 = vmatmul.f32.gmra.mxu0 %v1071
        %v1279 = vpop.f32.mrf.mxu0
        %v1280 = vadd.f32 0.0, %v1279
        %1281 = vmatmul.f32.gmra.mxu0 %v1074
        %v1282 = vpop.f32.mrf.mxu0
        %v1283 = vadd.f32 0.0, %v1282
        %1284 = vmatmul.f32.gmra.mxu0 %v1077
        %v1285 = vpop.f32.mrf.mxu0
        %v1286 = vadd.f32 0.0, %v1285
        %1287 = vmatmul.f32.gmra.mxu0 %v1080
        %v1288 = vpop.f32.mrf.mxu0
        %v1289 = vadd.f32 0.0, %v1288
        %1290 = vmatmul.f32.gmra.mxu0 %v1083
        %v1291 = vpop.f32.mrf.mxu0
        %v1292 = vadd.f32 0.0, %v1291
        %1293 = vmatmul.f32.gmra.mxu0 %v1086
        %v1294 = vpop.f32.mrf.mxu0
        %v1295 = vadd.f32 0.0, %v1294
        %1296 = vmatmul.f32.gmra.mxu0 %v1089
        %v1297 = vpop.f32.mrf.mxu0
        %v1298 = vadd.f32 0.0, %v1297
        %1299 = vmatmul.f32.gmra.mxu0 %v1092
        %v1300 = vpop.f32.mrf.mxu0
        %v1301 = vadd.f32 0.0, %v1300
        %1302 = vmatmul.f32.gmra.mxu0 %v1095
        %v1303 = vpop.f32.mrf.mxu0
        %v1304 = vadd.f32 0.0, %v1303
        %1305 = vmatmul.f32.gmra.mxu0 %v1098
        %v1306 = vpop.f32.mrf.mxu0
        %v1307 = vadd.f32 0.0, %v1306
        %1308 = vmatmul.f32.gmra.mxu0 %v1101
        %v1309 = vpop.f32.mrf.mxu0
        %v1310 = vadd.f32 0.0, %v1309
        %1311 = vmatmul.f32.gmra.mxu0 %v1104
        %v1312 = vpop.f32.mrf.mxu0
        %v1313 = vadd.f32 0.0, %v1312
        %1314 = vmatmul.f32.gmra.mxu0 %v1107
        %v1315 = vpop.f32.mrf.mxu0
        %v1316 = vadd.f32 0.0, %v1315
        %1317 = vmatmul.f32.gmra.mxu0 %v1110
        %v1318 = vpop.f32.mrf.mxu0
        %v1319 = vadd.f32 0.0, %v1318
        %1320 = vdwg.mxu0
        %v1321 = vmax.f32 %v1130, %v1154
        %v1322 = vmax.f32 %v1133, %v1157
        %v1323 = vmax.f32 %v1136, %v1160
        %v1324 = vmax.f32 %v1139, %v1163
        %v1325 = vmax.f32 %v1142, %v1166
        %v1326 = vmax.f32 %v1145, %v1169
        %v1327 = vmax.f32 %v1148, %v1172
        %v1328 = vmax.f32 %v1151, %v1175
        %v1329 = vmax.f32 %v1321, %v1178
        %v1330 = vmax.f32 %v1322, %v1181
        %v1331 = vmax.f32 %v1323, %v1184
        %v1332 = vmax.f32 %v1324, %v1187
        %v1333 = vmax.f32 %v1325, %v1190
        %v1334 = vmax.f32 %v1326, %v1193
        %v1335 = vmax.f32 %v1327, %v1196
        %v1336 = vmax.f32 %v1328, %v1199
        %v1337 = vmax.f32 %v1329, %v1202
        %v1338 = vmax.f32 %v1330, %v1205
        %v1339 = vmax.f32 %v1331, %v1208
        %v1340 = vmax.f32 %v1332, %v1211
        %v1341 = vmax.f32 %v1333, %v1214
        %v1342 = vmax.f32 %v1334, %v1217
        %v1343 = vmax.f32 %v1335, %v1220
        %v1344 = vmax.f32 %v1336, %v1223
        %v1345 = vmax.f32 %v1337, %v1226
        %v1346 = vmax.f32 %v1338, %v1229
        %v1347 = vmax.f32 %v1339, %v1232
        %v1348 = vmax.f32 %v1340, %v1235
        %v1349 = vmax.f32 %v1341, %v1238
        %v1350 = vmax.f32 %v1342, %v1241
        %v1351 = vmax.f32 %v1343, %v1244
        %v1352 = vmax.f32 %v1344, %v1247
        %v1353 = vmax.f32 %v1345, %v1250
        %v1354 = vmax.f32 %v1346, %v1253
        %v1355 = vmax.f32 %v1347, %v1256
        %v1356 = vmax.f32 %v1348, %v1259
        %v1357 = vmax.f32 %v1349, %v1262
        %v1358 = vmax.f32 %v1350, %v1265
        %v1359 = vmax.f32 %v1351, %v1268
        %v1360 = vmax.f32 %v1352, %v1271
        %v1361 = vmax.f32 %v1353, %v1274
        %v1362 = vmax.f32 %v1354, %v1277
        %v1363 = vmax.f32 %v1355, %v1280
        %v1364 = vmax.f32 %v1356, %v1283
        %v1365 = vmax.f32 %v1357, %v1286
        %v1366 = vmax.f32 %v1358, %v1289
        %v1367 = vmax.f32 %v1359, %v1292
        %v1368 = vmax.f32 %v1360, %v1295
        %v1369 = vmax.f32 %v1361, %v1298
        %v1370 = vmax.f32 %v1362, %v1301
        %v1371 = vmax.f32 %v1363, %v1304
        %v1372 = vmax.f32 %v1364, %v1307
        %v1373 = vmax.f32 %v1365, %v1310
        %v1374 = vmax.f32 %v1366, %v1313
        %v1375 = vmax.f32 %v1367, %v1316
        %v1376 = vmax.f32 %v1368, %v1319
        %v1377 = vld [vmem:[%s340] sm:$0xff]
        %v1378 = vld [vmem:[%s340 + $0x8] sm:$0xff]
        %v1379 = vld [vmem:[%s340 + $0x10] sm:$0xff]
        %v1380 = vld [vmem:[%s340 + $0x18] sm:$0xff]
        %v1381 = vld [vmem:[%s340 + $0x20] sm:$0xff]
        %v1382 = vld [vmem:[%s340 + $0x28] sm:$0xff]
        %v1383 = vld [vmem:[%s340 + $0x30] sm:$0xff]
        %v1384 = vld [vmem:[%s340 + $0x38] sm:$0xff]
        %v1386 = vperm.slane %v400, 0
        %1388 = vmatpush.msra.mxu0 %v383
        %1389 = vmatpush.msra.mxu0 %v382
        %1390 = vmatpush.msra.mxu0 %v381
        %1391 = vmatpush.msra.mxu0 %v380
        %1392 = vmatpush.msra.mxu0 %v379
        %1393 = vmatpush.msra.mxu0 %v378
        %1394 = vmatpush.msra.mxu0 %v377
        %1395 = vmatpush.msra.mxu0 %v376
        %1396 = vmatpush.msra.mxu0 %v375
        %1397 = vmatpush.msra.mxu0 %v374
        %1398 = vmatpush.msra.mxu0 %v373
        %1399 = vmatpush.msra.mxu0 %v372
        %1400 = vmatpush.msra.mxu0 %v371
        %1401 = vmatpush.msra.mxu0 %v370
        %1402 = vmatpush.msra.mxu0 %v369
        %1403 = vmatpush.msra.mxu0 %v368
        %1404 = vmatmul.f32.gmra.mxu0 %v1377
        %v1405 = vpop.f32.mrf.mxu0
        %v1406 = vadd.f32 %v1386, %v1405
        %1407 = vmatmul.f32.gmra.mxu0 %v1378
        %v1408 = vpop.f32.mrf.mxu0
        %v1409 = vadd.f32 %v1386, %v1408
        %1410 = vmatmul.f32.gmra.mxu0 %v1379
        %v1411 = vpop.f32.mrf.mxu0
        %v1412 = vadd.f32 %v1386, %v1411
        %1413 = vmatmul.f32.gmra.mxu0 %v1380
        %v1414 = vpop.f32.mrf.mxu0
        %v1415 = vadd.f32 %v1386, %v1414
        %1416 = vmatmul.f32.gmra.mxu0 %v1381
        %v1417 = vpop.f32.mrf.mxu0
        %v1418 = vadd.f32 %v1386, %v1417
        %1419 = vmatmul.f32.gmra.mxu0 %v1382
        %v1420 = vpop.f32.mrf.mxu0
        %v1421 = vadd.f32 %v1386, %v1420
        %1422 = vmatmul.f32.gmra.mxu0 %v1383
        %v1423 = vpop.f32.mrf.mxu0
        %v1424 = vadd.f32 %v1386, %v1423
        %1425 = vmatmul.f32.gmra.mxu0 %v1384
        %v1426 = vpop.f32.mrf.mxu0
        %v1427 = vadd.f32 %v1386, %v1426
        %1428 = vdwg.mxu0
        %1429 = vmatpush.msra.mxu0 %v399
        %1430 = vmatpush.msra.mxu0 %v398
        %1431 = vmatpush.msra.mxu0 %v397
        %1432 = vmatpush.msra.mxu0 %v396
        %1433 = vmatpush.msra.mxu0 %v395
        %1434 = vmatpush.msra.mxu0 %v394
        %1435 = vmatpush.msra.mxu0 %v393
        %1436 = vmatpush.msra.mxu0 %v392
        %1437 = vmatpush.msra.mxu0 %v391
        %1438 = vmatpush.msra.mxu0 %v390
        %1439 = vmatpush.msra.mxu0 %v389
        %1440 = vmatpush.msra.mxu0 %v388
        %1441 = vmatpush.msra.mxu0 %v387
        %1442 = vmatpush.msra.mxu0 %v386
        %1443 = vmatpush.msra.mxu0 %v385
        %1444 = vmatpush.msra.mxu0 %v384
        %1445 = vmatmul.f32.gmra.mxu0 %v1369
        %v1446 = vpop.f32.mrf.mxu0
        %v1447 = vadd.f32 %v1406, %v1446
        %1448 = vmatmul.f32.gmra.mxu0 %v1370
        %v1449 = vpop.f32.mrf.mxu0
        %v1450 = vadd.f32 %v1409, %v1449
        %1451 = vmatmul.f32.gmra.mxu0 %v1371
        %v1452 = vpop.f32.mrf.mxu0
        %v1453 = vadd.f32 %v1412, %v1452
        %1454 = vmatmul.f32.gmra.mxu0 %v1372
        %v1455 = vpop.f32.mrf.mxu0
        %v1456 = vadd.f32 %v1415, %v1455
        %1457 = vmatmul.f32.gmra.mxu0 %v1373
        %v1458 = vpop.f32.mrf.mxu0
        %v1459 = vadd.f32 %v1418, %v1458
        %1460 = vmatmul.f32.gmra.mxu0 %v1374
        %v1461 = vpop.f32.mrf.mxu0
        %v1462 = vadd.f32 %v1421, %v1461
        %1463 = vmatmul.f32.gmra.mxu0 %v1375
        %v1464 = vpop.f32.mrf.mxu0
        %v1465 = vadd.f32 %v1424, %v1464
        %1466 = vmatmul.f32.gmra.mxu0 %v1376
        %v1467 = vpop.f32.mrf.mxu0
        %v1468 = vadd.f32 %v1427, %v1467
        %1469 = vdwg.mxu0
        %v1470 = vmul.f32 %v1447, 0.5
        %v1471 = vmul.f32 %v1450, 0.5
        %v1472 = vmul.f32 %v1453, 0.5
        %v1473 = vmul.f32 %v1456, 0.5
        %v1474 = vmul.f32 %v1459, 0.5
        %v1475 = vmul.f32 %v1462, 0.5
        %v1476 = vmul.f32 %v1465, 0.5
        %v1477 = vmul.f32 %v1468, 0.5
        %v1478 = vmul.f32 %v1447, 0.044715
        %v1479 = vmul.f32 %v1450, 0.044715
        %v1480 = vmul.f32 %v1453, 0.044715
        %v1481 = vmul.f32 %v1456, 0.044715
        %v1482 = vmul.f32 %v1459, 0.044715
        %v1483 = vmul.f32 %v1462, 0.044715
        %v1484 = vmul.f32 %v1465, 0.044715
        %v1485 = vmul.f32 %v1468, 0.044715
        %v1486 = vmul.f32 %v1478, %v1447
        %v1487 = vmul.f32 %v1479, %v1450
        %v1488 = vmul.f32 %v1480, %v1453
        %v1489 = vmul.f32 %v1481, %v1456
        %v1490 = vmul.f32 %v1482, %v1459
        %v1491 = vmul.f32 %v1483, %v1462
        %v1492 = vmul.f32 %v1484, %v1465
        %v1493 = vmul.f32 %v1485, %v1468
        %v1494 = vmul.f32 %v1486, %v1447
        %v1495 = vmul.f32 %v1487, %v1450
        %v1496 = vmul.f32 %v1488, %v1453
        %v1497 = vmul.f32 %v1489, %v1456
        %v1498 = vmul.f32 %v1490, %v1459
        %v1499 = vmul.f32 %v1491, %v1462
        %v1500 = vmul.f32 %v1492, %v1465
        %v1501 = vmul.f32 %v1493, %v1468
        %v1502 = vadd.f32 %v1447, %v1494
        %v1503 = vadd.f32 %v1450, %v1495
        %v1504 = vadd.f32 %v1453, %v1496
        %v1505 = vadd.f32 %v1456, %v1497
        %v1506 = vadd.f32 %v1459, %v1498
        %v1507 = vadd.f32 %v1462, %v1499
        %v1508 = vadd.f32 %v1465, %v1500
        %v1509 = vadd.f32 %v1468, %v1501
        %v1510 = vmul.f32 %v1502, 0.7978846
        %v1511 = vmul.f32 %v1503, 0.7978846
        %v1512 = vmul.f32 %v1504, 0.7978846
        %v1513 = vmul.f32 %v1505, 0.7978846
        %v1514 = vmul.f32 %v1506, 0.7978846
        %v1515 = vmul.f32 %v1507, 0.7978846
        %v1516 = vmul.f32 %v1508, 0.7978846
        %v1517 = vmul.f32 %v1509, 0.7978846
        %v1518 = vtanh.pop %v1510
        %v1519 = vtanh.pop %v1511
        %v1520 = vtanh.pop %v1512
        %v1521 = vtanh.pop %v1513
        %v1522 = vtanh.pop %v1514
        %v1523 = vtanh.pop %v1515
        %v1524 = vtanh.pop %v1516
        %v1525 = vtanh.pop %v1517
        %v1526 = vadd.f32 %v1518, 1.0
        %v1527 = vadd.f32 %v1519, 1.0
        %v1528 = vadd.f32 %v1520, 1.0
        %v1529 = vadd.f32 %v1521, 1.0
        %v1530 = vadd.f32 %v1522, 1.0
        %v1531 = vadd.f32 %v1523, 1.0
        %v1532 = vadd.f32 %v1524, 1.0
        %v1533 = vadd.f32 %v1525, 1.0
        %v1534 = vmul.f32 %v1470, %v1526
        %v1535 = vmul.f32 %v1471, %v1527
        %v1536 = vmul.f32 %v1472, %v1528
        %v1537 = vmul.f32 %v1473, %v1529
        %v1538 = vmul.f32 %v1474, %v1530
        %v1539 = vmul.f32 %v1475, %v1531
        %v1540 = vmul.f32 %v1476, %v1532
        %v1541 = vmul.f32 %v1477, %v1533
        %1542 = vst [vmem:[%s335] sm:$0xff] %v1534
        %1543 = vst [vmem:[%s335 + $0x8] sm:$0xff] %v1535
        %1544 = vst [vmem:[%s335 + $0x10] sm:$0xff] %v1536
        %1545 = vst [vmem:[%s335 + $0x18] sm:$0xff] %v1537
        %1546 = vst [vmem:[%s335 + $0x20] sm:$0xff] %v1538
        %1547 = vst [vmem:[%s335 + $0x28] sm:$0xff] %v1539
        %1548 = vst [vmem:[%s335 + $0x30] sm:$0xff] %v1540
        %1549 = vst [vmem:[%s335 + $0x38] sm:$0xff] %v1541
        %s1550 = sand.u32 %s193, 1
        %s1551 = scalar_lea.sflag [#allocation4], %s1550
        %s1552 = sand.u32 %s193, 1
        %s1553 = smul.addr %s1552, 64
        %s1554 = scalar_lea.vmem [#allocation7], %s1553
        // Predicated region
        $region57: #{graph_sage_forward.1} parent=47 // pred_check
          %p1555 = pneg %p203
        $region58: #{graph_sage_forward.1} parent=47 // pred_check_branch
          %1557 = sbr.rel (%p1555) target = $region60
        $region59: #{graph_sage_forward.1} parent=47 // pred_region
          %1559 = vsyncadd %s1551, 0
          %s1560 = smul.addr %s23, 8
          %s1561 = smul.addr %s1560, 8
          %s1562 = scalar_lea.hbm %s7, %s1561
          %s1563 = sshll.u32 %s1554, 4
          %s1564 = int_to_ptr.vmem [resolvable:$true] %s1563
          %s1565 = sshll.u32 %s1562, 4
          %s1566 = int_to_ptr.hbm [resolvable:$true] %s1565
          %1571 = dma.vmem_to_hbm [thread:$0]  %s1564, 1024, %s1566, %s1551, 128, 128, 8
        $region60: #{graph_sage_forward.1} parent=47 // pred_fallthru
          _
      $region48: #{graph_sage_forward.1} parent=5 // pred_fallthru
        _
      %p1572 = scmp.le.s32.totalorder 2, %s18
      // Predicated region
      $region61: #{graph_sage_forward.1} parent=5 // pred_check
        %p1573 = pneg %p1572
      $region62: #{graph_sage_forward.1} parent=5 // pred_check_branch
        %1575 = sbr.rel (%p1573) target = $region64
      $region63: #{graph_sage_forward.1} parent=5 // pred_region
        %s1576 = ssub.s32 %s18, 2
        // Predicated region
        $region65: #{graph_sage_forward.1} parent=63 // pred_check
          %p1577 = pneg %p209
        $region66: #{graph_sage_forward.1} parent=63 // pred_check_branch
          %1579 = sbr.rel (%p1577) target = $region68
        $region67: #{graph_sage_forward.1} parent=63 // pred_region
          %s1580 = sand.u32 %s194, 1
          %s1581 = scalar_lea.sflag [#allocation4], %s1580
          %s1582 = sand.u32 %s194, 1
          %s1583 = smul.addr %s1582, 64
          %s1584 = scalar_lea.vmem [#allocation7], %s1583
          %1586 = dma.done %s1581, 1024
        $region68: #{graph_sage_forward.1} parent=63 // pred_fallthru
          _
      $region64: #{graph_sage_forward.1} parent=5 // pred_fallthru
        _
    $region6: #{graph_sage_forward.1} parent=1 // loop_footer
      %s22 = sadd.s32 1, %s18
    $region7: #{graph_sage_forward.1} parent=1 // loop_footer_branch
      %17 = sbr.rel target = $region3
    $region8: #{graph_sage_forward.1} parent=1 // loop_exit
      _
    %1587 = vsyncpa [#allocation3], 1
    %s1588 = scalar_lea.sflag [#allocation3], 1
    %1589 = vsyncpa %s1588, 1
    %1590 = vsyncpa [#allocation6], 1
    %1591 = vsyncpa [#allocation4], 1
    %s1592 = scalar_lea.sflag [#allocation4], 1
    %1593 = vsyncpa %s1592, 1

</llo_original>
